<compile_context>
chip_gen: v5e
topology: v5e:2x2
jax: 0.10.0
libtpu: 0.0.40
codegen_flags: <defaults>
</compile_context>

<pallas_src>
import functools

import jax
import jax.numpy as jnp
from jax.experimental import pallas as pl
from jax.experimental.pallas import tpu as pltpu


# ----------------------------------------------------------------------------
# Kernel: one (tm, D) row tile of z -> one (tm, 1) tile of the output.
# ----------------------------------------------------------------------------
def _predictor_kernel(z_ref, w1_ref, w2_ref, vec_ref, out_ref):
    x = z_ref[...]                                   # f32 [tm, D]
    P = vec_ref[...]                                 # f32 [10, D] packed vectors
    b1, g1, be1, a1 = P[0:1], P[1:2], P[2:3], P[3:4]
    b2, g2, be2, a2 = P[4:5], P[5:6], P[6:7], P[7:8]
    w3t, b3row = P[8:9], P[9:10]

    def layer_norm(h, g, b):
        mu = jnp.mean(h, axis=-1, keepdims=True)
        var = jnp.mean((h - mu) ** 2, axis=-1, keepdims=True)
        return (h - mu) * jax.lax.rsqrt(var + 1e-5) * g + b

    def prelu(h, a):
        return jnp.where(h >= 0.0, h, a * h)

    # Layer 1: Linear -> LN -> PReLU   (MXU in bf16, f32 accumulate)
    h = jnp.dot(x.astype(jnp.bfloat16), w1_ref[...],
                preferred_element_type=jnp.float32) + b1
    h = prelu(layer_norm(h, g1, be1), a1)

    # Layer 2: Linear -> LN -> PReLU
    h = jnp.dot(h.astype(jnp.bfloat16), w2_ref[...],
                preferred_element_type=jnp.float32) + b2
    h = prelu(layer_norm(h, g2, be2), a2)

    # Final D -> 1 projection on the VPU/XLU (avoid an N=1 MXU matmul).
    out_ref[...] = jnp.sum(h * w3t, axis=-1, keepdims=True) + b3row[:, 0:1]


# ----------------------------------------------------------------------------
# Wrapper
# ----------------------------------------------------------------------------
def _round_up(x, m):
    return ((x + m - 1) // m) * m


def _choose_tm(B, tm_max=512):
    """Adaptive row tile: big enough to amortize per-step overhead, but keep
    the grid length >= 2 for large B so v7x's 2 TensorCores both get work."""
    if B <= tm_max:
        return _round_up(max(B, 8), 8)          # single tile for small B
    n_tiles = max(2, pl.cdiv(B, tm_max))
    tm = _round_up(pl.cdiv(B, n_tiles), 8)
    return max(256, min(tm_max, tm))


@functools.partial(jax.jit, static_argnames=("tm",))
def _predictor_forward_impl(z, packed, tm):
    B, D = z.shape

    # Pad the batch to a multiple of the row tile; padded zero rows are safe
    # through LayerNorm (var=0, eps>0) and are sliced off at the end.
    Bp = pl.cdiv(B, tm) * tm
    if Bp != B:
        z = jnp.pad(z, ((0, Bp - B), (0, 0)))
    grid = (Bp // tm,)

    row = lambda i: (i, 0)    # tiled over batch rows
    rep = lambda i: (0, 0)    # same (full) block every grid step

    in_specs = [
        pl.BlockSpec((tm, D), row),      # z tile
        pl.BlockSpec((D, D), rep),       # W1 (bf16, resident)
        pl.BlockSpec((D, D), rep),       # W2 (bf16, resident)
        pl.BlockSpec((10, D), rep),      # packed vectors (resident)
    ]
    out_specs = pl.BlockSpec((tm, 1), row)

    flops = int(Bp) * (4 * D * D + 16 * D)
    bytes_accessed = int(Bp * D * 4 + 2 * D * D * 2 + 10 * D * 4 + Bp * 4)

    out = pl.pallas_call(
        _predictor_kernel,
        out_shape=jax.ShapeDtypeStruct((Bp, 1), jnp.float32),
        grid=grid,
        in_specs=in_specs,
        out_specs=out_specs,
        compiler_params=pltpu.CompilerParams(
            dimension_semantics=("parallel",),   # shard row tiles across TCs (v7x)
            vmem_limit_bytes=32 * 1024 * 1024,
        ),
        cost_estimate=pl.CostEstimate(
            flops=flops, transcendentals=2 * int(Bp), bytes_accessed=bytes_accessed),
    )(z, packed["w1_bf16"], packed["w2_bf16"], packed["vecs"])
    return out[:B]


def predictor_forward(z, packed, tm=None):
    if tm is None:
        tm = _choose_tm(int(z.shape[0]))
    return _predictor_forward_impl(z, packed, tm)


# ----------------------------------------------------------------------------
# One-time parameter packing (hoists bf16 weight casts + vector packing out of
# the per-call jitted path).
# ----------------------------------------------------------------------------
def pack_params(params):
    vecs = jnp.concatenate(
        [params["b1"], params["g1"], params["be1"], params["a1"],
         params["b2"], params["g2"], params["be2"], params["a2"],
         params["w3"].reshape(1, -1),                       # w3^T  (1, D)
         jnp.broadcast_to(params["b3"], (1, params["w1"].shape[0]))],  # b3 row
        axis=0).astype(jnp.float32)                         # (10, D)
    return {
        "w1_bf16": params["w1"].astype(jnp.bfloat16),
        "w2_bf16": params["w2"].astype(jnp.bfloat16),
        "vecs": vecs,
    }


# ----------------------------------------------------------------------------
# Pure-JAX reference (same bf16 matmul casts as the kernel)
# ----------------------------------------------------------------------------
def predictor_ref(z, params):
    bf16 = jnp.bfloat16

    def lin_bf16(h, w, b):
        return jnp.dot(h.astype(bf16), w.astype(bf16),
                       preferred_element_type=jnp.float32) + b

    def ln(h, g, b):
        mu = jnp.mean(h, axis=-1, keepdims=True)
        var = jnp.mean((h - mu) ** 2, axis=-1, keepdims=True)
        return (h - mu) * jax.lax.rsqrt(var + 1e-5) * g + b

    def prelu(h, a):
        return jnp.where(h >= 0.0, h, a * h)

    h = prelu(ln(lin_bf16(z, params["w1"], params["b1"]),
                 params["g1"], params["be1"]), params["a1"])
    h = prelu(ln(lin_bf16(h, params["w2"], params["b2"]),
                 params["g2"], params["be2"]), params["a2"])
    return jnp.dot(h, params["w3"], preferred_element_type=jnp.float32) + params["b3"]


# ----------------------------------------------------------------------------
# Parameter init matching Predictor.reset_parameters (xavier_uniform, bias=0,
# LayerNorm gamma=1 / beta=0, PReLU alpha=0.25 broadcast per-channel).
# ----------------------------------------------------------------------------
def init_params(key, graph_dim):
    D = graph_dim
    k1, k2, k3 = jax.random.split(key, 3)

    def xavier(k, shape):
        fan_in, fan_out = shape
        lim = (6.0 / (fan_in + fan_out)) ** 0.5
        return jax.random.uniform(k, shape, jnp.float32, -lim, lim)

    return {
        "w1": xavier(k1, (D, D)), "b1": jnp.zeros((1, D), jnp.float32),
        "g1": jnp.ones((1, D), jnp.float32), "be1": jnp.zeros((1, D), jnp.float32),
        "a1": jnp.full((1, D), 0.25, jnp.float32),
        "w2": xavier(k2, (D, D)), "b2": jnp.zeros((1, D), jnp.float32),
        "g2": jnp.ones((1, D), jnp.float32), "be2": jnp.zeros((1, D), jnp.float32),
        "a2": jnp.full((1, D), 0.25, jnp.float32),
        "w3": xavier(k3, (D, 1)), "b3": jnp.zeros((1, 1), jnp.float32),
    }


if __name__ == "__main__":
    graph_dim = 128            # lane-dense feature dim (multiple of 128)

    key = jax.random.PRNGKey(0)
    kz, kp = jax.random.split(key)
    params = init_params(kp, graph_dim)
    packed = pack_params(params)   # one-time bf16 cast + vector packing

    ok = True
    for batch in (600, 40):        # 600 -> 2 grid steps w/ padding; 40 -> single tile
        z = jax.random.normal(jax.random.fold_in(kz, batch),
                              (batch, graph_dim), jnp.float32)
        out = predictor_forward(z, packed)
        jax.block_until_ready(out)

        assert out.shape == (batch, 1)
        assert bool(jnp.all(jnp.isfinite(out)))
        ref = predictor_ref(z, params)
        ok = ok and bool(jnp.allclose(out, ref, rtol=2e-2, atol=2e-2))

    assert ok, "mismatch vs reference"
    print("KERNEL_OK")
</pallas_src>

<mosaic_0001>
module attributes {stable_mosaic.version = 11 : i64} {
  func.func @_predictor_kernel(%arg0: i32, %arg1: memref<304x128xf32, #tpu.memory_space<vmem>>, %arg2: memref<128x128xbf16, #tpu.memory_space<vmem>>, %arg3: memref<128x128xbf16, #tpu.memory_space<vmem>>, %arg4: memref<10x128xf32, #tpu.memory_space<vmem>>, %arg5: memref<304x1xf32, #tpu.memory_space<vmem>>) attributes {dimension_semantics = [#tpu.dimension_semantics<parallel>], iteration_bounds = array<i64: 2>, scalar_prefetch = 0 : i64, scratch_operands = 0 : i64, tpu.core_type = #tpu.core_type<tc>, window_params = [{transform_indices = @transform_0, window_bounds = array<i64: 304, 128>}, {pipeline_mode = #tpu.pipeline_mode<synchronous>, transform_indices = @transform_1, window_bounds = array<i64: 128, 128>}, {pipeline_mode = #tpu.pipeline_mode<synchronous>, transform_indices = @transform_2, window_bounds = array<i64: 128, 128>}, {pipeline_mode = #tpu.pipeline_mode<synchronous>, transform_indices = @transform_3, window_bounds = array<i64: 10, 128>}, {transform_indices = @transform_4, window_bounds = array<i64: 304, 1>}]} {
    %c0 = arith.constant 0 : index
    %c0_0 = arith.constant 0 : index
    %0 = vector.load %arg1[%c0, %c0_0] : memref<304x128xf32, #tpu.memory_space<vmem>>, vector<304x128xf32>
    %c0_1 = arith.constant 0 : index
    %c0_2 = arith.constant 0 : index
    %1 = vector.load %arg4[%c0_1, %c0_2] : memref<10x128xf32, #tpu.memory_space<vmem>>, vector<10x128xf32>
    %2 = vector.extract_strided_slice %1 {offsets = [0, 0], sizes = [1, 128], strides = [1, 1]} : vector<10x128xf32> to vector<1x128xf32>
    %3 = vector.extract_strided_slice %1 {offsets = [1, 0], sizes = [1, 128], strides = [1, 1]} : vector<10x128xf32> to vector<1x128xf32>
    %4 = vector.extract_strided_slice %1 {offsets = [2, 0], sizes = [1, 128], strides = [1, 1]} : vector<10x128xf32> to vector<1x128xf32>
    %5 = vector.extract_strided_slice %1 {offsets = [3, 0], sizes = [1, 128], strides = [1, 1]} : vector<10x128xf32> to vector<1x128xf32>
    %6 = vector.extract_strided_slice %1 {offsets = [4, 0], sizes = [1, 128], strides = [1, 1]} : vector<10x128xf32> to vector<1x128xf32>
    %7 = vector.extract_strided_slice %1 {offsets = [5, 0], sizes = [1, 128], strides = [1, 1]} : vector<10x128xf32> to vector<1x128xf32>
    %8 = vector.extract_strided_slice %1 {offsets = [6, 0], sizes = [1, 128], strides = [1, 1]} : vector<10x128xf32> to vector<1x128xf32>
    %9 = vector.extract_strided_slice %1 {offsets = [7, 0], sizes = [1, 128], strides = [1, 1]} : vector<10x128xf32> to vector<1x128xf32>
    %10 = vector.extract_strided_slice %1 {offsets = [8, 0], sizes = [1, 128], strides = [1, 1]} : vector<10x128xf32> to vector<1x128xf32>
    %11 = vector.extract_strided_slice %1 {offsets = [9, 0], sizes = [1, 128], strides = [1, 1]} : vector<10x128xf32> to vector<1x128xf32>
    %12 = arith.truncf %0 : vector<304x128xf32> to vector<304x128xbf16>
    %c0_3 = arith.constant 0 : index
    %c0_4 = arith.constant 0 : index
    %13 = vector.load %arg2[%c0_3, %c0_4] : memref<128x128xbf16, #tpu.memory_space<vmem>>, vector<128x128xbf16>
    %cst = arith.constant dense<0.000000e+00> : vector<304x128xf32>
    %14 = tpu.matmul %12, %13, %cst {dimension_numbers = #tpu.dot_dimension_numbers<[1], [0], [0], [1], [0, 0, 1, 1], [], []>} : vector<304x128xbf16>, vector<128x128xbf16>, vector<304x128xf32> -> vector<304x128xf32>
    %15 = vector.broadcast %2 : vector<1x128xf32> to vector<304x128xf32>
    %16 = arith.addf %14, %15 : vector<304x128xf32>
    %cst_5 = arith.constant dense<0.000000e+00> : vector<304xf32>
    %17 = vector.multi_reduction <add>, %16, %cst_5 [1] : vector<304x128xf32> to vector<304xf32>
    %18 = vector.shape_cast %17 : vector<304xf32> to vector<304x1xf32>
    %cst_6 = arith.constant 1.280000e+02 : f32
    %19 = vector.broadcast %cst_6 : f32 to vector<304x1xf32>
    %20 = arith.divf %18, %19 : vector<304x1xf32>
    %21 = vector.broadcast %20 : vector<304x1xf32> to vector<304x128xf32>
    %22 = arith.subf %16, %21 : vector<304x128xf32>
    %23 = arith.mulf %22, %22 : vector<304x128xf32>
    %cst_7 = arith.constant dense<0.000000e+00> : vector<304xf32>
    %24 = vector.multi_reduction <add>, %23, %cst_7 [1] : vector<304x128xf32> to vector<304xf32>
    %25 = vector.shape_cast %24 : vector<304xf32> to vector<304x1xf32>
    %cst_8 = arith.constant 1.280000e+02 : f32
    %26 = vector.broadcast %cst_8 : f32 to vector<304x1xf32>
    %27 = arith.divf %25, %26 : vector<304x1xf32>
    %28 = vector.broadcast %20 : vector<304x1xf32> to vector<304x128xf32>
    %29 = arith.subf %16, %28 : vector<304x128xf32>
    %cst_9 = arith.constant 9.99999974E-6 : f32
    %30 = vector.broadcast %cst_9 : f32 to vector<304x1xf32>
    %31 = arith.addf %27, %30 : vector<304x1xf32>
    %32 = math.rsqrt %31 : vector<304x1xf32>
    %33 = vector.broadcast %32 : vector<304x1xf32> to vector<304x128xf32>
    %34 = arith.mulf %29, %33 : vector<304x128xf32>
    %35 = vector.broadcast %3 : vector<1x128xf32> to vector<304x128xf32>
    %36 = arith.mulf %34, %35 : vector<304x128xf32>
    %37 = vector.broadcast %4 : vector<1x128xf32> to vector<304x128xf32>
    %38 = arith.addf %36, %37 : vector<304x128xf32>
    %cst_10 = arith.constant 0.000000e+00 : f32
    %39 = vector.broadcast %cst_10 : f32 to vector<304x128xf32>
    %40 = arith.cmpf oge, %38, %39 : vector<304x128xf32>
    %41 = vector.broadcast %5 : vector<1x128xf32> to vector<304x128xf32>
    %42 = arith.mulf %41, %38 : vector<304x128xf32>
    %43 = arith.select %40, %38, %42 : vector<304x128xi1>, vector<304x128xf32>
    %44 = arith.truncf %43 : vector<304x128xf32> to vector<304x128xbf16>
    %c0_11 = arith.constant 0 : index
    %c0_12 = arith.constant 0 : index
    %45 = vector.load %arg3[%c0_11, %c0_12] : memref<128x128xbf16, #tpu.memory_space<vmem>>, vector<128x128xbf16>
    %cst_13 = arith.constant dense<0.000000e+00> : vector<304x128xf32>
    %46 = tpu.matmul %44, %45, %cst_13 {dimension_numbers = #tpu.dot_dimension_numbers<[1], [0], [0], [1], [0, 0, 1, 1], [], []>} : vector<304x128xbf16>, vector<128x128xbf16>, vector<304x128xf32> -> vector<304x128xf32>
    %47 = vector.broadcast %6 : vector<1x128xf32> to vector<304x128xf32>
    %48 = arith.addf %46, %47 : vector<304x128xf32>
    %cst_14 = arith.constant dense<0.000000e+00> : vector<304xf32>
    %49 = vector.multi_reduction <add>, %48, %cst_14 [1] : vector<304x128xf32> to vector<304xf32>
    %50 = vector.shape_cast %49 : vector<304xf32> to vector<304x1xf32>
    %cst_15 = arith.constant 1.280000e+02 : f32
    %51 = vector.broadcast %cst_15 : f32 to vector<304x1xf32>
    %52 = arith.divf %50, %51 : vector<304x1xf32>
    %53 = vector.broadcast %52 : vector<304x1xf32> to vector<304x128xf32>
    %54 = arith.subf %48, %53 : vector<304x128xf32>
    %55 = arith.mulf %54, %54 : vector<304x128xf32>
    %cst_16 = arith.constant dense<0.000000e+00> : vector<304xf32>
    %56 = vector.multi_reduction <add>, %55, %cst_16 [1] : vector<304x128xf32> to vector<304xf32>
    %57 = vector.shape_cast %56 : vector<304xf32> to vector<304x1xf32>
    %cst_17 = arith.constant 1.280000e+02 : f32
    %58 = vector.broadcast %cst_17 : f32 to vector<304x1xf32>
    %59 = arith.divf %57, %58 : vector<304x1xf32>
    %60 = vector.broadcast %52 : vector<304x1xf32> to vector<304x128xf32>
    %61 = arith.subf %48, %60 : vector<304x128xf32>
    %cst_18 = arith.constant 9.99999974E-6 : f32
    %62 = vector.broadcast %cst_18 : f32 to vector<304x1xf32>
    %63 = arith.addf %59, %62 : vector<304x1xf32>
    %64 = math.rsqrt %63 : vector<304x1xf32>
    %65 = vector.broadcast %64 : vector<304x1xf32> to vector<304x128xf32>
    %66 = arith.mulf %61, %65 : vector<304x128xf32>
    %67 = vector.broadcast %7 : vector<1x128xf32> to vector<304x128xf32>
    %68 = arith.mulf %66, %67 : vector<304x128xf32>
    %69 = vector.broadcast %8 : vector<1x128xf32> to vector<304x128xf32>
    %70 = arith.addf %68, %69 : vector<304x128xf32>
    %cst_19 = arith.constant 0.000000e+00 : f32
    %71 = vector.broadcast %cst_19 : f32 to vector<304x128xf32>
    %72 = arith.cmpf oge, %70, %71 : vector<304x128xf32>
    %73 = vector.broadcast %9 : vector<1x128xf32> to vector<304x128xf32>
    %74 = arith.mulf %73, %70 : vector<304x128xf32>
    %75 = arith.select %72, %70, %74 : vector<304x128xi1>, vector<304x128xf32>
    %76 = vector.broadcast %10 : vector<1x128xf32> to vector<304x128xf32>
    %77 = arith.mulf %75, %76 : vector<304x128xf32>
    %cst_20 = arith.constant dense<0.000000e+00> : vector<304xf32>
    %78 = vector.multi_reduction <add>, %77, %cst_20 [1] : vector<304x128xf32> to vector<304xf32>
    %79 = vector.shape_cast %78 : vector<304xf32> to vector<304x1xf32>
    %80 = vector.extract_strided_slice %11 {offsets = [0, 0], sizes = [1, 1], strides = [1, 1]} : vector<1x128xf32> to vector<1x1xf32>
    %81 = vector.broadcast %80 : vector<1x1xf32> to vector<304x1xf32>
    %82 = arith.addf %79, %81 : vector<304x1xf32>
    %c0_21 = arith.constant 0 : index
    %c0_22 = arith.constant 0 : index
    %83 = vector.load %arg5[%c0_21, %c0_22] : memref<304x1xf32, #tpu.memory_space<vmem>>, vector<304x1xf32>
    tpu.vector_store %arg5[%c0_21, %c0_22], %82 {strides = array<i32>} : memref<304x1xf32, #tpu.memory_space<vmem>>, vector<304x1xf32>,
    return
  }
  func.func @transform_0(%arg0: i32) -> (i32, i32) {
    %c0_i32 = arith.constant 0 : i32
    %c0_i32_0 = arith.constant 0 : i32
    return %arg0, %c0_i32 : i32, i32
  }
  func.func @transform_1(%arg0: i32) -> (i32, i32) {
    %c0_i32 = arith.constant 0 : i32
    %c0_i32_0 = arith.constant 0 : i32
    %c0_i32_1 = arith.constant 0 : i32
    return %c0_i32, %c0_i32_0 : i32, i32
  }
  func.func @transform_2(%arg0: i32) -> (i32, i32) {
    %c0_i32 = arith.constant 0 : i32
    %c0_i32_0 = arith.constant 0 : i32
    %c0_i32_1 = arith.constant 0 : i32
    return %c0_i32, %c0_i32_0 : i32, i32
  }
  func.func @transform_3(%arg0: i32) -> (i32, i32) {
    %c0_i32 = arith.constant 0 : i32
    %c0_i32_0 = arith.constant 0 : i32
    %c0_i32_1 = arith.constant 0 : i32
    return %c0_i32, %c0_i32_0 : i32, i32
  }
  func.func @transform_4(%arg0: i32) -> (i32, i32) {
    %c0_i32 = arith.constant 0 : i32
    %c0_i32_0 = arith.constant 0 : i32
    return %arg0, %c0_i32 : i32, i32
  }
}

</mosaic_0001>

<llo_original>
// kernel: _predictor_forward_impl.1
$region0: #{_predictor_forward_impl.1}
  #allocation0 [shape = 'u32[]', space=smem, size = 0x4, offset = 0x4, fixed_abs, tag = 'smem constant byte address 0x4 - core index']
  #allocation1 [shape = 'u32[72,128]{1,0:T(1,128)}', space=vmem, size = 0x9000, scoped, tag = 'internal scratch']
  %s0 = inlined_call_operand.vmem [shape: f32[608,128], index: 0, kind: input, shape index: {}]
  %s1 = inlined_call_operand.vmem [shape: bf16[128,128], index: 1, kind: input, shape index: {}]
  %s2 = inlined_call_operand.vmem [shape: bf16[128,128], index: 2, kind: input, shape index: {}]
  %s3 = inlined_call_operand.vmem [shape: f32[10,128], index: 3, kind: input, shape index: {}]
  %s4 = inlined_call_operand.vmem [shape: f32[608,1], index: 4, kind: output, shape index: {}]
  %s5 = sld [smem:[#allocation0]]
  $region49: #{_predictor_forward_impl.1} parent=0
    _
  %s7 = ssub.s32 1, %s5
  %s8 = scalar_select 0, %s7, %s5
  loop: start=0, step=1, limit=4
  $region2: #{_predictor_forward_impl.1} parent=0 // loop_pre_header
    _
  $region3: #{_predictor_forward_impl.1} parent=0 // loop_header
    %s10 = sphi 0, %s14
    %p11 = scmp.ge.s32.totalorder %s10, 4
    %s20 = sphi 0, %s22
    %s23 = sphi 0, %s20
    %s24 = sphi 0, %s23
    %s40 = sphi 0, %s24
    %s44 = sphi 0, %s44
    %s46 = sphi 0, %s44
    %s47 = sphi 0, %s46
    %s61 = sphi 0, %s47
    %s65 = sphi 0, %s65
    %s67 = sphi 0, %s65
    %s68 = sphi 0, %s67
    %s82 = sphi 0, %s68
    %s86 = sphi 0, %s86
    %s88 = sphi 0, %s86
    %s89 = sphi 0, %s88
    %s103 = sphi 0, %s89
    %s109 = sphi 0, %s111
    %s112 = sphi 0, %s109
    %s113 = sphi 0, %s112
    %s129 = sphi 0, %s113
  $region4: #{_predictor_forward_impl.1} parent=0 // loop_header_branch
    %13 = sbr.rel (%p11) target = $region8
  $region5: #{_predictor_forward_impl.1} parent=0 // loop_body
    %s15 = ssub.s32 %s10, 1
    %s16 = ssub.s32 %s10, 2
    %s17 = sadd.s32 %s10, 1
    %s18 = ssub.s32 %s10, %s17
    %p19 = scmp.eq.s32.totalorder %s18, 0
    %s21 = sadd.s32 %s20, 1
    %s22 = scalar_select %p19, %s20, %s21
    %p25 = pneg %p19
    %p26 = scmp.eq.s32.totalorder %s10, 1
    %p27 = por %p25, %p26
    %p28 = scmp.ne.s32.totalorder %s20, %s23
    %p29 = scmp.eq.s32.totalorder %s10, 0
    %p30 = por %p28, %p29
    %p31 = scmp.ne.s32.totalorder %s20, %s23
    %p32 = scmp.eq.s32.totalorder %s15, 1
    %p33 = por %p31, %p32
    %p34 = scmp.ne.s32.totalorder %s23, %s24
    %p35 = scmp.eq.s32.totalorder %s15, 0
    %p36 = por %p34, %p35
    %p37 = scmp.ne.s32.totalorder %s23, %s24
    %p38 = scmp.eq.s32.totalorder %s16, 1
    %p39 = por %p37, %p38
    %p41 = scmp.ne.s32.totalorder %s24, %s40
    %p42 = scmp.eq.s32.totalorder %s16, 0
    %p43 = por %p41, %p42
    %s45 = sadd.s32 %s44, 1
    %p48 = scmp.eq.s32.totalorder %s10, 1
    %p49 = scmp.ne.s32.totalorder %s44, %s46
    %p50 = scmp.eq.s32.totalorder %s10, 0
    %p51 = por %p49, %p50
    %p52 = scmp.ne.s32.totalorder %s44, %s46
    %p53 = scmp.eq.s32.totalorder %s15, 1
    %p54 = por %p52, %p53
    %p55 = scmp.ne.s32.totalorder %s46, %s47
    %p56 = scmp.eq.s32.totalorder %s15, 0
    %p57 = por %p55, %p56
    %p58 = scmp.ne.s32.totalorder %s46, %s47
    %p59 = scmp.eq.s32.totalorder %s16, 1
    %p60 = por %p58, %p59
    %p62 = scmp.ne.s32.totalorder %s47, %s61
    %p63 = scmp.eq.s32.totalorder %s16, 0
    %p64 = por %p62, %p63
    %s66 = sadd.s32 %s65, 1
    %p69 = scmp.eq.s32.totalorder %s10, 1
    %p70 = scmp.ne.s32.totalorder %s65, %s67
    %p71 = scmp.eq.s32.totalorder %s10, 0
    %p72 = por %p70, %p71
    %p73 = scmp.ne.s32.totalorder %s65, %s67
    %p74 = scmp.eq.s32.totalorder %s15, 1
    %p75 = por %p73, %p74
    %p76 = scmp.ne.s32.totalorder %s67, %s68
    %p77 = scmp.eq.s32.totalorder %s15, 0
    %p78 = por %p76, %p77
    %p79 = scmp.ne.s32.totalorder %s67, %s68
    %p80 = scmp.eq.s32.totalorder %s16, 1
    %p81 = por %p79, %p80
    %p83 = scmp.ne.s32.totalorder %s68, %s82
    %p84 = scmp.eq.s32.totalorder %s16, 0
    %p85 = por %p83, %p84
    %s87 = sadd.s32 %s86, 1
    %p90 = scmp.eq.s32.totalorder %s10, 1
    %p91 = scmp.ne.s32.totalorder %s86, %s88
    %p92 = scmp.eq.s32.totalorder %s10, 0
    %p93 = por %p91, %p92
    %p94 = scmp.ne.s32.totalorder %s86, %s88
    %p95 = scmp.eq.s32.totalorder %s15, 1
    %p96 = por %p94, %p95
    %p97 = scmp.ne.s32.totalorder %s88, %s89
    %p98 = scmp.eq.s32.totalorder %s15, 0
    %p99 = por %p97, %p98
    %p100 = scmp.ne.s32.totalorder %s88, %s89
    %p101 = scmp.eq.s32.totalorder %s16, 1
    %p102 = por %p100, %p101
    %p104 = scmp.ne.s32.totalorder %s89, %s103
    %p105 = scmp.eq.s32.totalorder %s16, 0
    %p106 = por %p104, %p105
    %s107 = ssub.s32 %s10, %s17
    %p108 = scmp.eq.s32.totalorder %s107, 0
    %s110 = sadd.s32 %s109, 1
    %s111 = scalar_select %p108, %s109, %s110
    %p114 = pneg %p108
    %p115 = scmp.eq.s32.totalorder %s10, 1
    %p116 = por %p114, %p115
    %p117 = scmp.ne.s32.totalorder %s109, %s112
    %p118 = scmp.eq.s32.totalorder %s10, 0
    %p119 = por %p117, %p118
    %p120 = scmp.ne.s32.totalorder %s109, %s112
    %p121 = scmp.eq.s32.totalorder %s15, 1
    %p122 = por %p120, %p121
    %p123 = scmp.ne.s32.totalorder %s112, %s113
    %p124 = scmp.eq.s32.totalorder %s15, 0
    %p125 = por %p123, %p124
    %p126 = scmp.ne.s32.totalorder %s112, %s113
    %p127 = scmp.eq.s32.totalorder %s16, 1
    %p128 = por %p126, %p127
    %p130 = scmp.ne.s32.totalorder %s113, %s129
    %p131 = scmp.eq.s32.totalorder %s16, 0
    %p132 = por %p130, %p131
    %p133 = scmp.le.s32.totalorder 1, %s10
    %p134 = scmp.lt.s32.totalorder %s10, 3
    %p135 = pnand %p133, %p134
    %p136 = pneg %p135
    // Predicated region
    $region9: #{_predictor_forward_impl.1} parent=5 // pred_check
      _
    $region10: #{_predictor_forward_impl.1} parent=5 // pred_check_branch
      %138 = sbr.rel (%p135) target = $region12
    $region11: #{_predictor_forward_impl.1} parent=5 // pred_region
      %s139 = ssub.s32 %s10, 1
      // Predicated region
      $region13: #{_predictor_forward_impl.1} parent=11 // pred_check
        %p140 = pneg %p57
      $region14: #{_predictor_forward_impl.1} parent=11 // pred_check_branch
        %142 = sbr.rel (%p140) target = $region16
      $region15: #{_predictor_forward_impl.1} parent=11 // pred_region
        _
      $region16: #{_predictor_forward_impl.1} parent=11 // pred_fallthru
        _
      // Predicated region
      $region17: #{_predictor_forward_impl.1} parent=11 // pred_check
        %p143 = pneg %p78
      $region18: #{_predictor_forward_impl.1} parent=11 // pred_check_branch
        %145 = sbr.rel (%p143) target = $region20
      $region19: #{_predictor_forward_impl.1} parent=11 // pred_region
        _
      $region20: #{_predictor_forward_impl.1} parent=11 // pred_fallthru
        _
      // Predicated region
      $region21: #{_predictor_forward_impl.1} parent=11 // pred_check
        %p146 = pneg %p99
      $region22: #{_predictor_forward_impl.1} parent=11 // pred_check_branch
        %148 = sbr.rel (%p146) target = $region24
      $region23: #{_predictor_forward_impl.1} parent=11 // pred_region
        _
      $region24: #{_predictor_forward_impl.1} parent=11 // pred_fallthru
        _
    $region12: #{_predictor_forward_impl.1} parent=5 // pred_fallthru
      _
    %p149 = scmp.lt.s32.totalorder %s10, 2
    // Predicated region
    $region25: #{_predictor_forward_impl.1} parent=5 // pred_check
      %p150 = pneg %p149
    $region26: #{_predictor_forward_impl.1} parent=5 // pred_check_branch
      %152 = sbr.rel (%p150) target = $region28
    $region27: #{_predictor_forward_impl.1} parent=5 // pred_region
      // Predicated region
      $region29: #{_predictor_forward_impl.1} parent=27 // pred_check
        %p153 = pneg %p30
      $region30: #{_predictor_forward_impl.1} parent=27 // pred_check_branch
        %155 = sbr.rel (%p153) target = $region32
      $region31: #{_predictor_forward_impl.1} parent=27 // pred_region
        %s156 = smul.u32 38, %s10
        %p157 = scmp.lt.s32.totalorder %s156, 75
        %s158 = scalar_select %p157, %s156, 75
        %s159 = smul.addr %s158, 8
        %s160 = scalar_lea.vmem %s0, %s159
        %s161 = smul.u32 38, %s10
      $region32: #{_predictor_forward_impl.1} parent=27 // pred_fallthru
        _
    $region28: #{_predictor_forward_impl.1} parent=5 // pred_fallthru
      _
    %p162 = scmp.le.s32.totalorder 1, %s10
    %p163 = scmp.lt.s32.totalorder %s10, 3
    %p164 = pnand %p162, %p163
    %p165 = pneg %p164
    // Predicated region
    $region33: #{_predictor_forward_impl.1} parent=5 // pred_check
      _
    $region34: #{_predictor_forward_impl.1} parent=5 // pred_check_branch
      %167 = sbr.rel (%p164) target = $region36
    $region35: #{_predictor_forward_impl.1} parent=5 // pred_region
      %s168 = ssub.s32 %s10, 1
      %s169 = smul.u32 38, %s15
      %p170 = scmp.lt.s32.totalorder %s169, 75
      %s171 = scalar_select %p170, %s169, 75
      %s172 = smul.addr %s171, 8
      %s173 = scalar_lea.vmem %s0, %s172
      %p174 = pneg %p36
      %p175 = pneg %p33
      %p176 = pneg %p57
      %p177 = pneg %p54
      %p178 = pneg %p78
      %p179 = pneg %p75
      %p180 = pneg %p99
      %p181 = pneg %p96
      %p182 = pneg %p125
      %p183 = pneg %p122
      %s184 = smul.u32 38, %s15
      %p185 = scmp.lt.s32.totalorder %s184, 75
      %s186 = scalar_select %p185, %s184, 75
      %s187 = smul.addr %s186, 8
      %s188 = scalar_lea.vmem %s4, %s187
      %s189 = smul.u32 38, %s15
      %p190 = scmp.lt.s32.totalorder %s189, 75
      %s191 = scalar_select %p190, %s189, 75
      %s192 = smul.addr %s191, 8
      %s193 = scalar_lea.vmem %s0, %s192
      %s194 = smul.u32 38, %s15
      %s195 = smul.u32 38, %s15
      %p196 = scmp.lt.s32.totalorder %s195, 75
      %s197 = scalar_select %p196, %s195, 75
      %s198 = smul.addr %s197, 8
      %s199 = scalar_lea.vmem %s4, %s198
      %s200 = smul.u32 38, %s15
      %v201 = vld [vmem:[%s193] sm:$0xff]
      %v202 = vld [vmem:[%s193 + $0x8] sm:$0xff]
      %v203 = vld [vmem:[%s193 + $0x10] sm:$0xff]
      %v204 = vld [vmem:[%s193 + $0x18] sm:$0xff]
      %v205 = vld [vmem:[%s193 + $0x20] sm:$0xff]
      %v206 = vld [vmem:[%s193 + $0x28] sm:$0xff]
      %v207 = vld [vmem:[%s193 + $0x30] sm:$0xff]
      %v208 = vld [vmem:[%s193 + $0x38] sm:$0xff]
      %v209 = vld [vmem:[%s193 + $0x40] sm:$0xff]
      %v210 = vld [vmem:[%s193 + $0x48] sm:$0xff]
      %v211 = vld [vmem:[%s193 + $0x50] sm:$0xff]
      %v212 = vld [vmem:[%s193 + $0x58] sm:$0xff]
      %v213 = vld [vmem:[%s193 + $0x60] sm:$0xff]
      %v214 = vld [vmem:[%s193 + $0x68] sm:$0xff]
      %v215 = vld [vmem:[%s193 + $0x70] sm:$0xff]
      %v216 = vld [vmem:[%s193 + $0x78] sm:$0xff]
      %v217 = vld [vmem:[%s193 + $0x80] sm:$0xff]
      %v218 = vld [vmem:[%s193 + $0x88] sm:$0xff]
      %v219 = vld [vmem:[%s193 + $0x90] sm:$0xff]
      %v220 = vld [vmem:[%s193 + $0x98] sm:$0xff]
      %v221 = vld [vmem:[%s193 + $0xa0] sm:$0xff]
      %v222 = vld [vmem:[%s193 + $0xa8] sm:$0xff]
      %v223 = vld [vmem:[%s193 + $0xb0] sm:$0xff]
      %v224 = vld [vmem:[%s193 + $0xb8] sm:$0xff]
      %v225 = vld [vmem:[%s193 + $0xc0] sm:$0xff]
      %v226 = vld [vmem:[%s193 + $0xc8] sm:$0xff]
      %v227 = vld [vmem:[%s193 + $0xd0] sm:$0xff]
      %v228 = vld [vmem:[%s193 + $0xd8] sm:$0xff]
      %v229 = vld [vmem:[%s193 + $0xe0] sm:$0xff]
      %v230 = vld [vmem:[%s193 + $0xe8] sm:$0xff]
      %v231 = vld [vmem:[%s193 + $0xf0] sm:$0xff]
      %v232 = vld [vmem:[%s193 + $0xf8] sm:$0xff]
      %v233 = vld [vmem:[%s193 + $0x100] sm:$0xff]
      %v234 = vld [vmem:[%s193 + $0x108] sm:$0xff]
      %v235 = vld [vmem:[%s193 + $0x110] sm:$0xff]
      %v236 = vld [vmem:[%s193 + $0x118] sm:$0xff]
      %v237 = vld [vmem:[%s193 + $0x120] sm:$0xff]
      %v238 = vld [vmem:[%s193 + $0x128] sm:$0xff]
      %v239 = vld [vmem:[%s3] sm:$0xff]
      %v240 = vld [vmem:[%s3 + $0x8] sm:$0x3]
      %v241 = vpack.c.bf16 %v202, %v201
      %v242 = vpack.c.bf16 %v204, %v203
      %v243 = vpack.c.bf16 %v206, %v205
      %v244 = vpack.c.bf16 %v208, %v207
      %v245 = vpack.c.bf16 %v210, %v209
      %v246 = vpack.c.bf16 %v212, %v211
      %v247 = vpack.c.bf16 %v214, %v213
      %v248 = vpack.c.bf16 %v216, %v215
      %v249 = vpack.c.bf16 %v218, %v217
      %v250 = vpack.c.bf16 %v220, %v219
      %v251 = vpack.c.bf16 %v222, %v221
      %v252 = vpack.c.bf16 %v224, %v223
      %v253 = vpack.c.bf16 %v226, %v225
      %v254 = vpack.c.bf16 %v228, %v227
      %v255 = vpack.c.bf16 %v230, %v229
      %v256 = vpack.c.bf16 %v232, %v231
      %v257 = vpack.c.bf16 %v234, %v233
      %v258 = vpack.c.bf16 %v236, %v235
      %v259 = vpack.c.bf16 %v238, %v237
      %v260 = vld [vmem:[%s1] sm:$0xf]
      %v261 = vld [vmem:[%s1 + $0x4] sm:$0xf]
      %v262 = vld [vmem:[%s1 + $0x8] sm:$0xf]
      %v263 = vld [vmem:[%s1 + $0xc] sm:$0xf]
      %v264 = vld [vmem:[%s1 + $0x10] sm:$0xf]
      %v265 = vld [vmem:[%s1 + $0x14] sm:$0xf]
      %v266 = vld [vmem:[%s1 + $0x18] sm:$0xf]
      %v267 = vld [vmem:[%s1 + $0x1c] sm:$0xf]
      %v268 = vld [vmem:[%s1 + $0x20] sm:$0xf]
      %v269 = vld [vmem:[%s1 + $0x24] sm:$0xf]
      %v270 = vld [vmem:[%s1 + $0x28] sm:$0xf]
      %v271 = vld [vmem:[%s1 + $0x2c] sm:$0xf]
      %v272 = vld [vmem:[%s1 + $0x30] sm:$0xf]
      %v273 = vld [vmem:[%s1 + $0x34] sm:$0xf]
      %v274 = vld [vmem:[%s1 + $0x38] sm:$0xf]
      %v275 = vld [vmem:[%s1 + $0x3c] sm:$0xf]
      %v276 = vperm.slane %v239, 0
      %v293 = vunpack.c.l.b16 %v260
      %v294 = vunpack.c.l.b16 %v261
      %v295 = vunpack.c.l.b16 %v262
      %v296 = vunpack.c.l.b16 %v263
      %v297 = vunpack.c.l.b16 %v264
      %v298 = vunpack.c.l.b16 %v265
      %v299 = vunpack.c.l.b16 %v266
      %v300 = vunpack.c.l.b16 %v267
      %v301 = vunpack.c.l.b16 %v268
      %v302 = vunpack.c.l.b16 %v269
      %v303 = vunpack.c.l.b16 %v270
      %v304 = vunpack.c.l.b16 %v271
      %v305 = vunpack.c.l.b16 %v272
      %v306 = vunpack.c.l.b16 %v273
      %v307 = vunpack.c.l.b16 %v274
      %v308 = vunpack.c.l.b16 %v275
      %v309 = vpack.c.b16 %v294, %v293
      %v310 = vpack.c.b16 %v296, %v295
      %v311 = vpack.c.b16 %v298, %v297
      %v312 = vpack.c.b16 %v300, %v299
      %v313 = vpack.c.b16 %v302, %v301
      %v314 = vpack.c.b16 %v304, %v303
      %v315 = vpack.c.b16 %v306, %v305
      %v316 = vpack.c.b16 %v308, %v307
      %325 = vmatpush.bf16.msra.mxu0 %v316
      %326 = vmatpush.bf16.msra.mxu0 %v315
      %327 = vmatpush.bf16.msra.mxu0 %v314
      %328 = vmatpush.bf16.msra.mxu0 %v313
      %329 = vmatpush.bf16.msra.mxu0 %v312
      %330 = vmatpush.bf16.msra.mxu0 %v311
      %331 = vmatpush.bf16.msra.mxu0 %v310
      %332 = vmatpush.bf16.msra.mxu0 %v309
      %333 = vmatmul.bf16.gmra.mxu0 %v241
      %v334 = vpop.f32.mrf.mxu0
      %v335 = vadd.f32 %v276, %v334
      %v336 = vpop.f32.mrf.mxu0
      %v337 = vadd.f32 %v276, %v336
      %338 = vmatmul.bf16.gmra.mxu0 %v242
      %v339 = vpop.f32.mrf.mxu0
      %v340 = vadd.f32 %v276, %v339
      %v341 = vpop.f32.mrf.mxu0
      %v342 = vadd.f32 %v276, %v341
      %343 = vmatmul.bf16.gmra.mxu0 %v243
      %v344 = vpop.f32.mrf.mxu0
      %v345 = vadd.f32 %v276, %v344
      %v346 = vpop.f32.mrf.mxu0
      %v347 = vadd.f32 %v276, %v346
      %348 = vmatmul.bf16.gmra.mxu0 %v244
      %v349 = vpop.f32.mrf.mxu0
      %v350 = vadd.f32 %v276, %v349
      %v351 = vpop.f32.mrf.mxu0
      %v352 = vadd.f32 %v276, %v351
      %353 = vmatmul.bf16.gmra.mxu0 %v245
      %v354 = vpop.f32.mrf.mxu0
      %v355 = vadd.f32 %v276, %v354
      %v356 = vpop.f32.mrf.mxu0
      %v357 = vadd.f32 %v276, %v356
      %358 = vmatmul.bf16.gmra.mxu0 %v246
      %v359 = vpop.f32.mrf.mxu0
      %v360 = vadd.f32 %v276, %v359
      %v361 = vpop.f32.mrf.mxu0
      %v362 = vadd.f32 %v276, %v361
      %363 = vmatmul.bf16.gmra.mxu0 %v247
      %v364 = vpop.f32.mrf.mxu0
      %v365 = vadd.f32 %v276, %v364
      %v366 = vpop.f32.mrf.mxu0
      %v367 = vadd.f32 %v276, %v366
      %368 = vmatmul.bf16.gmra.mxu0 %v248
      %v369 = vpop.f32.mrf.mxu0
      %v370 = vadd.f32 %v276, %v369
      %v371 = vpop.f32.mrf.mxu0
      %v372 = vadd.f32 %v276, %v371
      %373 = vmatmul.bf16.gmra.mxu0 %v249
      %v374 = vpop.f32.mrf.mxu0
      %v375 = vadd.f32 %v276, %v374
      %v376 = vpop.f32.mrf.mxu0
      %v377 = vadd.f32 %v276, %v376
      %378 = vmatmul.bf16.gmra.mxu0 %v250
      %v379 = vpop.f32.mrf.mxu0
      %v380 = vadd.f32 %v276, %v379
      %v381 = vpop.f32.mrf.mxu0
      %v382 = vadd.f32 %v276, %v381
      %383 = vmatmul.bf16.gmra.mxu0 %v251
      %v384 = vpop.f32.mrf.mxu0
      %v385 = vadd.f32 %v276, %v384
      %v386 = vpop.f32.mrf.mxu0
      %v387 = vadd.f32 %v276, %v386
      %388 = vmatmul.bf16.gmra.mxu0 %v252
      %v389 = vpop.f32.mrf.mxu0
      %v390 = vadd.f32 %v276, %v389
      %v391 = vpop.f32.mrf.mxu0
      %v392 = vadd.f32 %v276, %v391
      %393 = vmatmul.bf16.gmra.mxu0 %v253
      %v394 = vpop.f32.mrf.mxu0
      %v395 = vadd.f32 %v276, %v394
      %v396 = vpop.f32.mrf.mxu0
      %v397 = vadd.f32 %v276, %v396
      %398 = vmatmul.bf16.gmra.mxu0 %v254
      %v399 = vpop.f32.mrf.mxu0
      %v400 = vadd.f32 %v276, %v399
      %v401 = vpop.f32.mrf.mxu0
      %v402 = vadd.f32 %v276, %v401
      %403 = vmatmul.bf16.gmra.mxu0 %v255
      %v404 = vpop.f32.mrf.mxu0
      %v405 = vadd.f32 %v276, %v404
      %v406 = vpop.f32.mrf.mxu0
      %v407 = vadd.f32 %v276, %v406
      %408 = vmatmul.bf16.gmra.mxu0 %v256
      %v409 = vpop.f32.mrf.mxu0
      %v410 = vadd.f32 %v276, %v409
      %v411 = vpop.f32.mrf.mxu0
      %v412 = vadd.f32 %v276, %v411
      %413 = vmatmul.bf16.gmra.mxu0 %v257
      %v414 = vpop.f32.mrf.mxu0
      %v415 = vadd.f32 %v276, %v414
      %v416 = vpop.f32.mrf.mxu0
      %v417 = vadd.f32 %v276, %v416
      %418 = vmatmul.bf16.gmra.mxu0 %v258
      %v419 = vpop.f32.mrf.mxu0
      %v420 = vadd.f32 %v276, %v419
      %v421 = vpop.f32.mrf.mxu0
      %v422 = vadd.f32 %v276, %v421
      %423 = vmatmul.bf16.gmra.mxu0 %v259
      %v424 = vpop.f32.mrf.mxu0
      %v425 = vadd.f32 %v276, %v424
      %v426 = vpop.f32.mrf.mxu0
      %v427 = vadd.f32 %v276, %v426
      %428 = vdwg.mxu0
      %429 = vadd.xlane.f32.xlu0 %v335
      %v430 = vpop.xlane.xlu0 %429
      %431 = vadd.xlane.f32.xlu0 %v337
      %v432 = vpop.xlane.xlu0 %431
      %433 = vadd.xlane.f32.xlu0 %v340
      %v434 = vpop.xlane.xlu0 %433
      %435 = vadd.xlane.f32.xlu0 %v342
      %v436 = vpop.xlane.xlu0 %435
      %437 = vadd.xlane.f32.xlu0 %v345
      %v438 = vpop.xlane.xlu0 %437
      %439 = vadd.xlane.f32.xlu0 %v347
      %v440 = vpop.xlane.xlu0 %439
      %441 = vadd.xlane.f32.xlu0 %v350
      %v442 = vpop.xlane.xlu0 %441
      %443 = vadd.xlane.f32.xlu0 %v352
      %v444 = vpop.xlane.xlu0 %443
      %445 = vadd.xlane.f32.xlu0 %v355
      %v446 = vpop.xlane.xlu0 %445
      %447 = vadd.xlane.f32.xlu0 %v357
      %v448 = vpop.xlane.xlu0 %447
      %449 = vadd.xlane.f32.xlu0 %v360
      %v450 = vpop.xlane.xlu0 %449
      %451 = vadd.xlane.f32.xlu0 %v362
      %v452 = vpop.xlane.xlu0 %451
      %453 = vadd.xlane.f32.xlu0 %v365
      %v454 = vpop.xlane.xlu0 %453
      %455 = vadd.xlane.f32.xlu0 %v367
      %v456 = vpop.xlane.xlu0 %455
      %457 = vadd.xlane.f32.xlu0 %v370
      %v458 = vpop.xlane.xlu0 %457
      %459 = vadd.xlane.f32.xlu0 %v372
      %v460 = vpop.xlane.xlu0 %459
      %461 = vadd.xlane.f32.xlu0 %v375
      %v462 = vpop.xlane.xlu0 %461
      %463 = vadd.xlane.f32.xlu0 %v377
      %v464 = vpop.xlane.xlu0 %463
      %465 = vadd.xlane.f32.xlu0 %v380
      %v466 = vpop.xlane.xlu0 %465
      %467 = vadd.xlane.f32.xlu0 %v382
      %v468 = vpop.xlane.xlu0 %467
      %469 = vadd.xlane.f32.xlu0 %v385
      %v470 = vpop.xlane.xlu0 %469
      %471 = vadd.xlane.f32.xlu0 %v387
      %v472 = vpop.xlane.xlu0 %471
      %473 = vadd.xlane.f32.xlu0 %v390
      %v474 = vpop.xlane.xlu0 %473
      %475 = vadd.xlane.f32.xlu0 %v392
      %v476 = vpop.xlane.xlu0 %475
      %477 = vadd.xlane.f32.xlu0 %v395
      %v478 = vpop.xlane.xlu0 %477
      %479 = vadd.xlane.f32.xlu0 %v397
      %v480 = vpop.xlane.xlu0 %479
      %481 = vadd.xlane.f32.xlu0 %v400
      %v482 = vpop.xlane.xlu0 %481
      %483 = vadd.xlane.f32.xlu0 %v402
      %v484 = vpop.xlane.xlu0 %483
      %485 = vadd.xlane.f32.xlu0 %v405
      %v486 = vpop.xlane.xlu0 %485
      %487 = vadd.xlane.f32.xlu0 %v407
      %v488 = vpop.xlane.xlu0 %487
      %489 = vadd.xlane.f32.xlu0 %v410
      %v490 = vpop.xlane.xlu0 %489
      %491 = vadd.xlane.f32.xlu0 %v412
      %v492 = vpop.xlane.xlu0 %491
      %493 = vadd.xlane.f32.xlu0 %v415
      %v494 = vpop.xlane.xlu0 %493
      %495 = vadd.xlane.f32.xlu0 %v417
      %v496 = vpop.xlane.xlu0 %495
      %497 = vadd.xlane.f32.xlu0 %v420
      %v498 = vpop.xlane.xlu0 %497
      %499 = vadd.xlane.f32.xlu0 %v422
      %v500 = vpop.xlane.xlu0 %499
      %501 = vadd.xlane.f32.xlu0 %v425
      %v502 = vpop.xlane.xlu0 %501
      %503 = vadd.xlane.f32.xlu0 %v427
      %v504 = vpop.xlane.xlu0 %503
      %v505 = vrcp.pop 128.0
      %v506 = vmul.f32 128.0, %v505
      %v507 = vsub.f32 1.0, %v506
      %v508 = vmul.f32 %v505, %v507
      %v509 = vadd.f32 %v505, %v508
      %vm510 = vweird.f32 %v505
      %v511 = vsel %vm510, %v505, %v509
      %v512 = vmul.f32 %v430, %v511
      %v513 = vmul.f32 %v432, %v511
      %v514 = vmul.f32 %v434, %v511
      %v515 = vmul.f32 %v436, %v511
      %v516 = vmul.f32 %v438, %v511
      %v517 = vmul.f32 %v440, %v511
      %v518 = vmul.f32 %v442, %v511
      %v519 = vmul.f32 %v444, %v511
      %v520 = vmul.f32 %v446, %v511
      %v521 = vmul.f32 %v448, %v511
      %v522 = vmul.f32 %v450, %v511
      %v523 = vmul.f32 %v452, %v511
      %v524 = vmul.f32 %v454, %v511
      %v525 = vmul.f32 %v456, %v511
      %v526 = vmul.f32 %v458, %v511
      %v527 = vmul.f32 %v460, %v511
      %v528 = vmul.f32 %v462, %v511
      %v529 = vmul.f32 %v464, %v511
      %v530 = vmul.f32 %v466, %v511
      %v531 = vmul.f32 %v468, %v511
      %v532 = vmul.f32 %v470, %v511
      %v533 = vmul.f32 %v472, %v511
      %v534 = vmul.f32 %v474, %v511
      %v535 = vmul.f32 %v476, %v511
      %v536 = vmul.f32 %v478, %v511
      %v537 = vmul.f32 %v480, %v511
      %v538 = vmul.f32 %v482, %v511
      %v539 = vmul.f32 %v484, %v511
      %v540 = vmul.f32 %v486, %v511
      %v541 = vmul.f32 %v488, %v511
      %v542 = vmul.f32 %v490, %v511
      %v543 = vmul.f32 %v492, %v511
      %v544 = vmul.f32 %v494, %v511
      %v545 = vmul.f32 %v496, %v511
      %v546 = vmul.f32 %v498, %v511
      %v547 = vmul.f32 %v500, %v511
      %v548 = vmul.f32 %v502, %v511
      %v549 = vmul.f32 %v504, %v511
      %v550 = vsub.f32 %v335, %v512
      %v551 = vsub.f32 %v337, %v513
      %v552 = vsub.f32 %v340, %v514
      %v553 = vsub.f32 %v342, %v515
      %v554 = vsub.f32 %v345, %v516
      %v555 = vsub.f32 %v347, %v517
      %v556 = vsub.f32 %v350, %v518
      %v557 = vsub.f32 %v352, %v519
      %v558 = vsub.f32 %v355, %v520
      %v559 = vsub.f32 %v357, %v521
      %v560 = vsub.f32 %v360, %v522
      %v561 = vsub.f32 %v362, %v523
      %v562 = vsub.f32 %v365, %v524
      %v563 = vsub.f32 %v367, %v525
      %v564 = vsub.f32 %v370, %v526
      %v565 = vsub.f32 %v372, %v527
      %v566 = vsub.f32 %v375, %v528
      %v567 = vsub.f32 %v377, %v529
      %v568 = vsub.f32 %v380, %v530
      %v569 = vsub.f32 %v382, %v531
      %v570 = vsub.f32 %v385, %v532
      %v571 = vsub.f32 %v387, %v533
      %v572 = vsub.f32 %v390, %v534
      %v573 = vsub.f32 %v392, %v535
      %v574 = vsub.f32 %v395, %v536
      %v575 = vsub.f32 %v397, %v537
      %v576 = vsub.f32 %v400, %v538
      %v577 = vsub.f32 %v402, %v539
      %v578 = vsub.f32 %v405, %v540
      %v579 = vsub.f32 %v407, %v541
      %v580 = vsub.f32 %v410, %v542
      %v581 = vsub.f32 %v412, %v543
      %v582 = vsub.f32 %v415, %v544
      %v583 = vsub.f32 %v417, %v545
      %v584 = vsub.f32 %v420, %v546
      %v585 = vsub.f32 %v422, %v547
      %v586 = vsub.f32 %v425, %v548
      %v587 = vsub.f32 %v427, %v549
      %v588 = vmul.f32 %v550, %v550
      %v589 = vmul.f32 %v551, %v551
      %v590 = vmul.f32 %v552, %v552
      %v591 = vmul.f32 %v553, %v553
      %v592 = vmul.f32 %v554, %v554
      %v593 = vmul.f32 %v555, %v555
      %v594 = vmul.f32 %v556, %v556
      %v595 = vmul.f32 %v557, %v557
      %v596 = vmul.f32 %v558, %v558
      %v597 = vmul.f32 %v559, %v559
      %v598 = vmul.f32 %v560, %v560
      %v599 = vmul.f32 %v561, %v561
      %v600 = vmul.f32 %v562, %v562
      %v601 = vmul.f32 %v563, %v563
      %v602 = vmul.f32 %v564, %v564
      %v603 = vmul.f32 %v565, %v565
      %v604 = vmul.f32 %v566, %v566
      %v605 = vmul.f32 %v567, %v567
      %v606 = vmul.f32 %v568, %v568
      %v607 = vmul.f32 %v569, %v569
      %v608 = vmul.f32 %v570, %v570
      %v609 = vmul.f32 %v571, %v571
      %v610 = vmul.f32 %v572, %v572
      %v611 = vmul.f32 %v573, %v573
      %v612 = vmul.f32 %v574, %v574
      %v613 = vmul.f32 %v575, %v575
      %v614 = vmul.f32 %v576, %v576
      %v615 = vmul.f32 %v577, %v577
      %v616 = vmul.f32 %v578, %v578
      %v617 = vmul.f32 %v579, %v579
      %v618 = vmul.f32 %v580, %v580
      %v619 = vmul.f32 %v581, %v581
      %v620 = vmul.f32 %v582, %v582
      %v621 = vmul.f32 %v583, %v583
      %v622 = vmul.f32 %v584, %v584
      %v623 = vmul.f32 %v585, %v585
      %v624 = vmul.f32 %v586, %v586
      %v625 = vmul.f32 %v587, %v587
      %626 = vadd.xlane.f32.xlu0 %v588
      %v627 = vpop.xlane.xlu0 %626
      %628 = vadd.xlane.f32.xlu0 %v589
      %v629 = vpop.xlane.xlu0 %628
      %630 = vadd.xlane.f32.xlu0 %v590
      %v631 = vpop.xlane.xlu0 %630
      %632 = vadd.xlane.f32.xlu0 %v591
      %v633 = vpop.xlane.xlu0 %632
      %634 = vadd.xlane.f32.xlu0 %v592
      %v635 = vpop.xlane.xlu0 %634
      %636 = vadd.xlane.f32.xlu0 %v593
      %v637 = vpop.xlane.xlu0 %636
      %638 = vadd.xlane.f32.xlu0 %v594
      %v639 = vpop.xlane.xlu0 %638
      %640 = vadd.xlane.f32.xlu0 %v595
      %v641 = vpop.xlane.xlu0 %640
      %642 = vadd.xlane.f32.xlu0 %v596
      %v643 = vpop.xlane.xlu0 %642
      %644 = vadd.xlane.f32.xlu0 %v597
      %v645 = vpop.xlane.xlu0 %644
      %646 = vadd.xlane.f32.xlu0 %v598
      %v647 = vpop.xlane.xlu0 %646
      %648 = vadd.xlane.f32.xlu0 %v599
      %v649 = vpop.xlane.xlu0 %648
      %650 = vadd.xlane.f32.xlu0 %v600
      %v651 = vpop.xlane.xlu0 %650
      %652 = vadd.xlane.f32.xlu0 %v601
      %v653 = vpop.xlane.xlu0 %652
      %654 = vadd.xlane.f32.xlu0 %v602
      %v655 = vpop.xlane.xlu0 %654
      %656 = vadd.xlane.f32.xlu0 %v603
      %v657 = vpop.xlane.xlu0 %656
      %658 = vadd.xlane.f32.xlu0 %v604
      %v659 = vpop.xlane.xlu0 %658
      %660 = vadd.xlane.f32.xlu0 %v605
      %v661 = vpop.xlane.xlu0 %660
      %662 = vadd.xlane.f32.xlu0 %v606
      %v663 = vpop.xlane.xlu0 %662
      %664 = vadd.xlane.f32.xlu0 %v607
      %v665 = vpop.xlane.xlu0 %664
      %666 = vadd.xlane.f32.xlu0 %v608
      %v667 = vpop.xlane.xlu0 %666
      %668 = vadd.xlane.f32.xlu0 %v609
      %v669 = vpop.xlane.xlu0 %668
      %670 = vadd.xlane.f32.xlu0 %v610
      %v671 = vpop.xlane.xlu0 %670
      %672 = vadd.xlane.f32.xlu0 %v611
      %v673 = vpop.xlane.xlu0 %672
      %674 = vadd.xlane.f32.xlu0 %v612
      %v675 = vpop.xlane.xlu0 %674
      %676 = vadd.xlane.f32.xlu0 %v613
      %v677 = vpop.xlane.xlu0 %676
      %678 = vadd.xlane.f32.xlu0 %v614
      %v679 = vpop.xlane.xlu0 %678
      %680 = vadd.xlane.f32.xlu0 %v615
      %v681 = vpop.xlane.xlu0 %680
      %682 = vadd.xlane.f32.xlu0 %v616
      %v683 = vpop.xlane.xlu0 %682
      %684 = vadd.xlane.f32.xlu0 %v617
      %v685 = vpop.xlane.xlu0 %684
      %686 = vadd.xlane.f32.xlu0 %v618
      %v687 = vpop.xlane.xlu0 %686
      %688 = vadd.xlane.f32.xlu0 %v619
      %v689 = vpop.xlane.xlu0 %688
      %690 = vadd.xlane.f32.xlu0 %v620
      %v691 = vpop.xlane.xlu0 %690
      %692 = vadd.xlane.f32.xlu0 %v621
      %v693 = vpop.xlane.xlu0 %692
      %694 = vadd.xlane.f32.xlu0 %v622
      %v695 = vpop.xlane.xlu0 %694
      %696 = vadd.xlane.f32.xlu0 %v623
      %v697 = vpop.xlane.xlu0 %696
      %698 = vadd.xlane.f32.xlu0 %v624
      %v699 = vpop.xlane.xlu0 %698
      %700 = vadd.xlane.f32.xlu0 %v625
      %v701 = vpop.xlane.xlu0 %700
      %v702 = vmul.f32 %v627, %v511
      %v703 = vmul.f32 %v629, %v511
      %v704 = vmul.f32 %v631, %v511
      %v705 = vmul.f32 %v633, %v511
      %v706 = vmul.f32 %v635, %v511
      %v707 = vmul.f32 %v637, %v511
      %v708 = vmul.f32 %v639, %v511
      %v709 = vmul.f32 %v641, %v511
      %v710 = vmul.f32 %v643, %v511
      %v711 = vmul.f32 %v645, %v511
      %v712 = vmul.f32 %v647, %v511
      %v713 = vmul.f32 %v649, %v511
      %v714 = vmul.f32 %v651, %v511
      %v715 = vmul.f32 %v653, %v511
      %v716 = vmul.f32 %v655, %v511
      %v717 = vmul.f32 %v657, %v511
      %v718 = vmul.f32 %v659, %v511
      %v719 = vmul.f32 %v661, %v511
      %v720 = vmul.f32 %v663, %v511
      %v721 = vmul.f32 %v665, %v511
      %v722 = vmul.f32 %v667, %v511
      %v723 = vmul.f32 %v669, %v511
      %v724 = vmul.f32 %v671, %v511
      %v725 = vmul.f32 %v673, %v511
      %v726 = vmul.f32 %v675, %v511
      %v727 = vmul.f32 %v677, %v511
      %v728 = vmul.f32 %v679, %v511
      %v729 = vmul.f32 %v681, %v511
      %v730 = vmul.f32 %v683, %v511
      %v731 = vmul.f32 %v685, %v511
      %v732 = vmul.f32 %v687, %v511
      %v733 = vmul.f32 %v689, %v511
      %v734 = vmul.f32 %v691, %v511
      %v735 = vmul.f32 %v693, %v511
      %v736 = vmul.f32 %v695, %v511
      %v737 = vmul.f32 %v697, %v511
      %v738 = vmul.f32 %v699, %v511
      %v739 = vmul.f32 %v701, %v511
      %v740 = vadd.f32 %v702, 1e-05
      %v741 = vadd.f32 %v703, 1e-05
      %v742 = vadd.f32 %v704, 1e-05
      %v743 = vadd.f32 %v705, 1e-05
      %v744 = vadd.f32 %v706, 1e-05
      %v745 = vadd.f32 %v707, 1e-05
      %v746 = vadd.f32 %v708, 1e-05
      %v747 = vadd.f32 %v709, 1e-05
      %v748 = vadd.f32 %v710, 1e-05
      %v749 = vadd.f32 %v711, 1e-05
      %v750 = vadd.f32 %v712, 1e-05
      %v751 = vadd.f32 %v713, 1e-05
      %v752 = vadd.f32 %v714, 1e-05
      %v753 = vadd.f32 %v715, 1e-05
      %v754 = vadd.f32 %v716, 1e-05
      %v755 = vadd.f32 %v717, 1e-05
      %v756 = vadd.f32 %v718, 1e-05
      %v757 = vadd.f32 %v719, 1e-05
      %v758 = vadd.f32 %v720, 1e-05
      %v759 = vadd.f32 %v721, 1e-05
      %v760 = vadd.f32 %v722, 1e-05
      %v761 = vadd.f32 %v723, 1e-05
      %v762 = vadd.f32 %v724, 1e-05
      %v763 = vadd.f32 %v725, 1e-05
      %v764 = vadd.f32 %v726, 1e-05
      %v765 = vadd.f32 %v727, 1e-05
      %v766 = vadd.f32 %v728, 1e-05
      %v767 = vadd.f32 %v729, 1e-05
      %v768 = vadd.f32 %v730, 1e-05
      %v769 = vadd.f32 %v731, 1e-05
      %v770 = vadd.f32 %v732, 1e-05
      %v771 = vadd.f32 %v733, 1e-05
      %v772 = vadd.f32 %v734, 1e-05
      %v773 = vadd.f32 %v735, 1e-05
      %v774 = vadd.f32 %v736, 1e-05
      %v775 = vadd.f32 %v737, 1e-05
      %v776 = vadd.f32 %v738, 1e-05
      %v777 = vadd.f32 %v739, 1e-05
      %v778 = vrsqrt.pop %v740
      %v779 = vmul.f32 %v778, %v740
      %v780 = vmul.f32 %v779, %v778
      %v781 = vmul.f32 0.5, %v780
      %v782 = vsub.f32 1.5, %v781
      %v783 = vmul.f32 %v778, %v782
      %vm784 = vweird.f32 %v740
      %vm785 = vweird.f32 %v778
      %vm786 = vmor %vm784, %vm785
      %v787 = vsel %vm786, %v778, %v783
      %v788 = vrsqrt.pop %v741
      %v789 = vmul.f32 %v788, %v741
      %v790 = vmul.f32 %v789, %v788
      %v791 = vmul.f32 0.5, %v790
      %v792 = vsub.f32 1.5, %v791
      %v793 = vmul.f32 %v788, %v792
      %vm794 = vweird.f32 %v741
      %vm795 = vweird.f32 %v788
      %vm796 = vmor %vm794, %vm795
      %v797 = vsel %vm796, %v788, %v793
      %v798 = vrsqrt.pop %v742
      %v799 = vmul.f32 %v798, %v742
      %v800 = vmul.f32 %v799, %v798
      %v801 = vmul.f32 0.5, %v800
      %v802 = vsub.f32 1.5, %v801
      %v803 = vmul.f32 %v798, %v802
      %vm804 = vweird.f32 %v742
      %vm805 = vweird.f32 %v798
      %vm806 = vmor %vm804, %vm805
      %v807 = vsel %vm806, %v798, %v803
      %v808 = vrsqrt.pop %v743
      %v809 = vmul.f32 %v808, %v743
      %v810 = vmul.f32 %v809, %v808
      %v811 = vmul.f32 0.5, %v810
      %v812 = vsub.f32 1.5, %v811
      %v813 = vmul.f32 %v808, %v812
      %vm814 = vweird.f32 %v743
      %vm815 = vweird.f32 %v808
      %vm816 = vmor %vm814, %vm815
      %v817 = vsel %vm816, %v808, %v813
      %v818 = vrsqrt.pop %v744
      %v819 = vmul.f32 %v818, %v744
      %v820 = vmul.f32 %v819, %v818
      %v821 = vmul.f32 0.5, %v820
      %v822 = vsub.f32 1.5, %v821
      %v823 = vmul.f32 %v818, %v822
      %vm824 = vweird.f32 %v744
      %vm825 = vweird.f32 %v818
      %vm826 = vmor %vm824, %vm825
      %v827 = vsel %vm826, %v818, %v823
      %v828 = vrsqrt.pop %v745
      %v829 = vmul.f32 %v828, %v745
      %v830 = vmul.f32 %v829, %v828
      %v831 = vmul.f32 0.5, %v830
      %v832 = vsub.f32 1.5, %v831
      %v833 = vmul.f32 %v828, %v832
      %vm834 = vweird.f32 %v745
      %vm835 = vweird.f32 %v828
      %vm836 = vmor %vm834, %vm835
      %v837 = vsel %vm836, %v828, %v833
      %v838 = vrsqrt.pop %v746
      %v839 = vmul.f32 %v838, %v746
      %v840 = vmul.f32 %v839, %v838
      %v841 = vmul.f32 0.5, %v840
      %v842 = vsub.f32 1.5, %v841
      %v843 = vmul.f32 %v838, %v842
      %vm844 = vweird.f32 %v746
      %vm845 = vweird.f32 %v838
      %vm846 = vmor %vm844, %vm845
      %v847 = vsel %vm846, %v838, %v843
      %v848 = vrsqrt.pop %v747
      %v849 = vmul.f32 %v848, %v747
      %v850 = vmul.f32 %v849, %v848
      %v851 = vmul.f32 0.5, %v850
      %v852 = vsub.f32 1.5, %v851
      %v853 = vmul.f32 %v848, %v852
      %vm854 = vweird.f32 %v747
      %vm855 = vweird.f32 %v848
      %vm856 = vmor %vm854, %vm855
      %v857 = vsel %vm856, %v848, %v853
      %v858 = vrsqrt.pop %v748
      %v859 = vmul.f32 %v858, %v748
      %v860 = vmul.f32 %v859, %v858
      %v861 = vmul.f32 0.5, %v860
      %v862 = vsub.f32 1.5, %v861
      %v863 = vmul.f32 %v858, %v862
      %vm864 = vweird.f32 %v748
      %vm865 = vweird.f32 %v858
      %vm866 = vmor %vm864, %vm865
      %v867 = vsel %vm866, %v858, %v863
      %v868 = vrsqrt.pop %v749
      %v869 = vmul.f32 %v868, %v749
      %v870 = vmul.f32 %v869, %v868
      %v871 = vmul.f32 0.5, %v870
      %v872 = vsub.f32 1.5, %v871
      %v873 = vmul.f32 %v868, %v872
      %vm874 = vweird.f32 %v749
      %vm875 = vweird.f32 %v868
      %vm876 = vmor %vm874, %vm875
      %v877 = vsel %vm876, %v868, %v873
      %v878 = vrsqrt.pop %v750
      %v879 = vmul.f32 %v878, %v750
      %v880 = vmul.f32 %v879, %v878
      %v881 = vmul.f32 0.5, %v880
      %v882 = vsub.f32 1.5, %v881
      %v883 = vmul.f32 %v878, %v882
      %vm884 = vweird.f32 %v750
      %vm885 = vweird.f32 %v878
      %vm886 = vmor %vm884, %vm885
      %v887 = vsel %vm886, %v878, %v883
      %v888 = vrsqrt.pop %v751
      %v889 = vmul.f32 %v888, %v751
      %v890 = vmul.f32 %v889, %v888
      %v891 = vmul.f32 0.5, %v890
      %v892 = vsub.f32 1.5, %v891
      %v893 = vmul.f32 %v888, %v892
      %vm894 = vweird.f32 %v751
      %vm895 = vweird.f32 %v888
      %vm896 = vmor %vm894, %vm895
      %v897 = vsel %vm896, %v888, %v893
      %v898 = vrsqrt.pop %v752
      %v899 = vmul.f32 %v898, %v752
      %v900 = vmul.f32 %v899, %v898
      %v901 = vmul.f32 0.5, %v900
      %v902 = vsub.f32 1.5, %v901
      %v903 = vmul.f32 %v898, %v902
      %vm904 = vweird.f32 %v752
      %vm905 = vweird.f32 %v898
      %vm906 = vmor %vm904, %vm905
      %v907 = vsel %vm906, %v898, %v903
      %v908 = vrsqrt.pop %v753
      %v909 = vmul.f32 %v908, %v753
      %v910 = vmul.f32 %v909, %v908
      %v911 = vmul.f32 0.5, %v910
      %v912 = vsub.f32 1.5, %v911
      %v913 = vmul.f32 %v908, %v912
      %vm914 = vweird.f32 %v753
      %vm915 = vweird.f32 %v908
      %vm916 = vmor %vm914, %vm915
      %v917 = vsel %vm916, %v908, %v913
      %v918 = vrsqrt.pop %v754
      %v919 = vmul.f32 %v918, %v754
      %v920 = vmul.f32 %v919, %v918
      %v921 = vmul.f32 0.5, %v920
      %v922 = vsub.f32 1.5, %v921
      %v923 = vmul.f32 %v918, %v922
      %vm924 = vweird.f32 %v754
      %vm925 = vweird.f32 %v918
      %vm926 = vmor %vm924, %vm925
      %v927 = vsel %vm926, %v918, %v923
      %v928 = vrsqrt.pop %v755
      %v929 = vmul.f32 %v928, %v755
      %v930 = vmul.f32 %v929, %v928
      %v931 = vmul.f32 0.5, %v930
      %v932 = vsub.f32 1.5, %v931
      %v933 = vmul.f32 %v928, %v932
      %vm934 = vweird.f32 %v755
      %vm935 = vweird.f32 %v928
      %vm936 = vmor %vm934, %vm935
      %v937 = vsel %vm936, %v928, %v933
      %v938 = vrsqrt.pop %v756
      %v939 = vmul.f32 %v938, %v756
      %v940 = vmul.f32 %v939, %v938
      %v941 = vmul.f32 0.5, %v940
      %v942 = vsub.f32 1.5, %v941
      %v943 = vmul.f32 %v938, %v942
      %vm944 = vweird.f32 %v756
      %vm945 = vweird.f32 %v938
      %vm946 = vmor %vm944, %vm945
      %v947 = vsel %vm946, %v938, %v943
      %v948 = vrsqrt.pop %v757
      %v949 = vmul.f32 %v948, %v757
      %v950 = vmul.f32 %v949, %v948
      %v951 = vmul.f32 0.5, %v950
      %v952 = vsub.f32 1.5, %v951
      %v953 = vmul.f32 %v948, %v952
      %vm954 = vweird.f32 %v757
      %vm955 = vweird.f32 %v948
      %vm956 = vmor %vm954, %vm955
      %v957 = vsel %vm956, %v948, %v953
      %v958 = vrsqrt.pop %v758
      %v959 = vmul.f32 %v958, %v758
      %v960 = vmul.f32 %v959, %v958
      %v961 = vmul.f32 0.5, %v960
      %v962 = vsub.f32 1.5, %v961
      %v963 = vmul.f32 %v958, %v962
      %vm964 = vweird.f32 %v758
      %vm965 = vweird.f32 %v958
      %vm966 = vmor %vm964, %vm965
      %v967 = vsel %vm966, %v958, %v963
      %v968 = vrsqrt.pop %v759
      %v969 = vmul.f32 %v968, %v759
      %v970 = vmul.f32 %v969, %v968
      %v971 = vmul.f32 0.5, %v970
      %v972 = vsub.f32 1.5, %v971
      %v973 = vmul.f32 %v968, %v972
      %vm974 = vweird.f32 %v759
      %vm975 = vweird.f32 %v968
      %vm976 = vmor %vm974, %vm975
      %v977 = vsel %vm976, %v968, %v973
      %v978 = vrsqrt.pop %v760
      %v979 = vmul.f32 %v978, %v760
      %v980 = vmul.f32 %v979, %v978
      %v981 = vmul.f32 0.5, %v980
      %v982 = vsub.f32 1.5, %v981
      %v983 = vmul.f32 %v978, %v982
      %vm984 = vweird.f32 %v760
      %vm985 = vweird.f32 %v978
      %vm986 = vmor %vm984, %vm985
      %v987 = vsel %vm986, %v978, %v983
      %v988 = vrsqrt.pop %v761
      %v989 = vmul.f32 %v988, %v761
      %v990 = vmul.f32 %v989, %v988
      %v991 = vmul.f32 0.5, %v990
      %v992 = vsub.f32 1.5, %v991
      %v993 = vmul.f32 %v988, %v992
      %vm994 = vweird.f32 %v761
      %vm995 = vweird.f32 %v988
      %vm996 = vmor %vm994, %vm995
      %v997 = vsel %vm996, %v988, %v993
      %v998 = vrsqrt.pop %v762
      %v999 = vmul.f32 %v998, %v762
      %v1000 = vmul.f32 %v999, %v998
      %v1001 = vmul.f32 0.5, %v1000
      %v1002 = vsub.f32 1.5, %v1001
      %v1003 = vmul.f32 %v998, %v1002
      %vm1004 = vweird.f32 %v762
      %vm1005 = vweird.f32 %v998
      %vm1006 = vmor %vm1004, %vm1005
      %v1007 = vsel %vm1006, %v998, %v1003
      %v1008 = vrsqrt.pop %v763
      %v1009 = vmul.f32 %v1008, %v763
      %v1010 = vmul.f32 %v1009, %v1008
      %v1011 = vmul.f32 0.5, %v1010
      %v1012 = vsub.f32 1.5, %v1011
      %v1013 = vmul.f32 %v1008, %v1012
      %vm1014 = vweird.f32 %v763
      %vm1015 = vweird.f32 %v1008
      %vm1016 = vmor %vm1014, %vm1015
      %v1017 = vsel %vm1016, %v1008, %v1013
      %v1018 = vrsqrt.pop %v764
      %v1019 = vmul.f32 %v1018, %v764
      %v1020 = vmul.f32 %v1019, %v1018
      %v1021 = vmul.f32 0.5, %v1020
      %v1022 = vsub.f32 1.5, %v1021
      %v1023 = vmul.f32 %v1018, %v1022
      %vm1024 = vweird.f32 %v764
      %vm1025 = vweird.f32 %v1018
      %vm1026 = vmor %vm1024, %vm1025
      %v1027 = vsel %vm1026, %v1018, %v1023
      %v1028 = vrsqrt.pop %v765
      %v1029 = vmul.f32 %v1028, %v765
      %v1030 = vmul.f32 %v1029, %v1028
      %v1031 = vmul.f32 0.5, %v1030
      %v1032 = vsub.f32 1.5, %v1031
      %v1033 = vmul.f32 %v1028, %v1032
      %vm1034 = vweird.f32 %v765
      %vm1035 = vweird.f32 %v1028
      %vm1036 = vmor %vm1034, %vm1035
      %v1037 = vsel %vm1036, %v1028, %v1033
      %v1038 = vrsqrt.pop %v766
      %v1039 = vmul.f32 %v1038, %v766
      %v1040 = vmul.f32 %v1039, %v1038
      %v1041 = vmul.f32 0.5, %v1040
      %v1042 = vsub.f32 1.5, %v1041
      %v1043 = vmul.f32 %v1038, %v1042
      %vm1044 = vweird.f32 %v766
      %vm1045 = vweird.f32 %v1038
      %vm1046 = vmor %vm1044, %vm1045
      %v1047 = vsel %vm1046, %v1038, %v1043
      %v1048 = vrsqrt.pop %v767
      %v1049 = vmul.f32 %v1048, %v767
      %v1050 = vmul.f32 %v1049, %v1048
      %v1051 = vmul.f32 0.5, %v1050
      %v1052 = vsub.f32 1.5, %v1051
      %v1053 = vmul.f32 %v1048, %v1052
      %vm1054 = vweird.f32 %v767
      %vm1055 = vweird.f32 %v1048
      %vm1056 = vmor %vm1054, %vm1055
      %v1057 = vsel %vm1056, %v1048, %v1053
      %v1058 = vrsqrt.pop %v768
      %v1059 = vmul.f32 %v1058, %v768
      %v1060 = vmul.f32 %v1059, %v1058
      %v1061 = vmul.f32 0.5, %v1060
      %v1062 = vsub.f32 1.5, %v1061
      %v1063 = vmul.f32 %v1058, %v1062
      %vm1064 = vweird.f32 %v768
      %vm1065 = vweird.f32 %v1058
      %vm1066 = vmor %vm1064, %vm1065
      %v1067 = vsel %vm1066, %v1058, %v1063
      %v1068 = vrsqrt.pop %v769
      %v1069 = vmul.f32 %v1068, %v769
      %v1070 = vmul.f32 %v1069, %v1068
      %v1071 = vmul.f32 0.5, %v1070
      %v1072 = vsub.f32 1.5, %v1071
      %v1073 = vmul.f32 %v1068, %v1072
      %vm1074 = vweird.f32 %v769
      %vm1075 = vweird.f32 %v1068
      %vm1076 = vmor %vm1074, %vm1075
      %v1077 = vsel %vm1076, %v1068, %v1073
      %v1078 = vrsqrt.pop %v770
      %v1079 = vmul.f32 %v1078, %v770
      %v1080 = vmul.f32 %v1079, %v1078
      %v1081 = vmul.f32 0.5, %v1080
      %v1082 = vsub.f32 1.5, %v1081
      %v1083 = vmul.f32 %v1078, %v1082
      %vm1084 = vweird.f32 %v770
      %vm1085 = vweird.f32 %v1078
      %vm1086 = vmor %vm1084, %vm1085
      %v1087 = vsel %vm1086, %v1078, %v1083
      %v1088 = vrsqrt.pop %v771
      %v1089 = vmul.f32 %v1088, %v771
      %v1090 = vmul.f32 %v1089, %v1088
      %v1091 = vmul.f32 0.5, %v1090
      %v1092 = vsub.f32 1.5, %v1091
      %v1093 = vmul.f32 %v1088, %v1092
      %vm1094 = vweird.f32 %v771
      %vm1095 = vweird.f32 %v1088
      %vm1096 = vmor %vm1094, %vm1095
      %v1097 = vsel %vm1096, %v1088, %v1093
      %v1098 = vrsqrt.pop %v772
      %v1099 = vmul.f32 %v1098, %v772
      %v1100 = vmul.f32 %v1099, %v1098
      %v1101 = vmul.f32 0.5, %v1100
      %v1102 = vsub.f32 1.5, %v1101
      %v1103 = vmul.f32 %v1098, %v1102
      %vm1104 = vweird.f32 %v772
      %vm1105 = vweird.f32 %v1098
      %vm1106 = vmor %vm1104, %vm1105
      %v1107 = vsel %vm1106, %v1098, %v1103
      %v1108 = vrsqrt.pop %v773
      %v1109 = vmul.f32 %v1108, %v773
      %v1110 = vmul.f32 %v1109, %v1108
      %v1111 = vmul.f32 0.5, %v1110
      %v1112 = vsub.f32 1.5, %v1111
      %v1113 = vmul.f32 %v1108, %v1112
      %vm1114 = vweird.f32 %v773
      %vm1115 = vweird.f32 %v1108
      %vm1116 = vmor %vm1114, %vm1115
      %v1117 = vsel %vm1116, %v1108, %v1113
      %v1118 = vrsqrt.pop %v774
      %v1119 = vmul.f32 %v1118, %v774
      %v1120 = vmul.f32 %v1119, %v1118
      %v1121 = vmul.f32 0.5, %v1120
      %v1122 = vsub.f32 1.5, %v1121
      %v1123 = vmul.f32 %v1118, %v1122
      %vm1124 = vweird.f32 %v774
      %vm1125 = vweird.f32 %v1118
      %vm1126 = vmor %vm1124, %vm1125
      %v1127 = vsel %vm1126, %v1118, %v1123
      %v1128 = vrsqrt.pop %v775
      %v1129 = vmul.f32 %v1128, %v775
      %v1130 = vmul.f32 %v1129, %v1128
      %v1131 = vmul.f32 0.5, %v1130
      %v1132 = vsub.f32 1.5, %v1131
      %v1133 = vmul.f32 %v1128, %v1132
      %vm1134 = vweird.f32 %v775
      %vm1135 = vweird.f32 %v1128
      %vm1136 = vmor %vm1134, %vm1135
      %v1137 = vsel %vm1136, %v1128, %v1133
      %v1138 = vrsqrt.pop %v776
      %v1139 = vmul.f32 %v1138, %v776
      %v1140 = vmul.f32 %v1139, %v1138
      %v1141 = vmul.f32 0.5, %v1140
      %v1142 = vsub.f32 1.5, %v1141
      %v1143 = vmul.f32 %v1138, %v1142
      %vm1144 = vweird.f32 %v776
      %vm1145 = vweird.f32 %v1138
      %vm1146 = vmor %vm1144, %vm1145
      %v1147 = vsel %vm1146, %v1138, %v1143
      %v1148 = vrsqrt.pop %v777
      %v1149 = vmul.f32 %v1148, %v777
      %v1150 = vmul.f32 %v1149, %v1148
      %v1151 = vmul.f32 0.5, %v1150
      %v1152 = vsub.f32 1.5, %v1151
      %v1153 = vmul.f32 %v1148, %v1152
      %vm1154 = vweird.f32 %v777
      %vm1155 = vweird.f32 %v1148
      %vm1156 = vmor %vm1154, %vm1155
      %v1157 = vsel %vm1156, %v1148, %v1153
      %v1158 = vmul.f32 %v550, %v787
      %v1159 = vmul.f32 %v551, %v797
      %v1160 = vmul.f32 %v552, %v807
      %v1161 = vmul.f32 %v553, %v817
      %v1162 = vmul.f32 %v554, %v827
      %v1163 = vmul.f32 %v555, %v837
      %v1164 = vmul.f32 %v556, %v847
      %v1165 = vmul.f32 %v557, %v857
      %v1166 = vmul.f32 %v558, %v867
      %v1167 = vmul.f32 %v559, %v877
      %v1168 = vmul.f32 %v560, %v887
      %v1169 = vmul.f32 %v561, %v897
      %v1170 = vmul.f32 %v562, %v907
      %v1171 = vmul.f32 %v563, %v917
      %v1172 = vmul.f32 %v564, %v927
      %v1173 = vmul.f32 %v565, %v937
      %v1174 = vmul.f32 %v566, %v947
      %v1175 = vmul.f32 %v567, %v957
      %v1176 = vmul.f32 %v568, %v967
      %v1177 = vmul.f32 %v569, %v977
      %v1178 = vmul.f32 %v570, %v987
      %v1179 = vmul.f32 %v571, %v997
      %v1180 = vmul.f32 %v572, %v1007
      %v1181 = vmul.f32 %v573, %v1017
      %v1182 = vmul.f32 %v574, %v1027
      %v1183 = vmul.f32 %v575, %v1037
      %v1184 = vmul.f32 %v576, %v1047
      %v1185 = vmul.f32 %v577, %v1057
      %v1186 = vmul.f32 %v578, %v1067
      %v1187 = vmul.f32 %v579, %v1077
      %v1188 = vmul.f32 %v580, %v1087
      %v1189 = vmul.f32 %v581, %v1097
      %v1190 = vmul.f32 %v582, %v1107
      %v1191 = vmul.f32 %v583, %v1117
      %v1192 = vmul.f32 %v584, %v1127
      %v1193 = vmul.f32 %v585, %v1137
      %v1194 = vmul.f32 %v586, %v1147
      %v1195 = vmul.f32 %v587, %v1157
      %v1196 = vperm.slane %v239, 1
      %v1197 = vmul.f32 %v1158, %v1196
      %v1198 = vmul.f32 %v1159, %v1196
      %v1199 = vmul.f32 %v1160, %v1196
      %v1200 = vmul.f32 %v1161, %v1196
      %v1201 = vmul.f32 %v1162, %v1196
      %v1202 = vmul.f32 %v1163, %v1196
      %v1203 = vmul.f32 %v1164, %v1196
      %v1204 = vmul.f32 %v1165, %v1196
      %v1205 = vmul.f32 %v1166, %v1196
      %v1206 = vmul.f32 %v1167, %v1196
      %v1207 = vmul.f32 %v1168, %v1196
      %v1208 = vmul.f32 %v1169, %v1196
      %v1209 = vmul.f32 %v1170, %v1196
      %v1210 = vmul.f32 %v1171, %v1196
      %v1211 = vmul.f32 %v1172, %v1196
      %v1212 = vmul.f32 %v1173, %v1196
      %v1213 = vmul.f32 %v1174, %v1196
      %v1214 = vmul.f32 %v1175, %v1196
      %v1215 = vmul.f32 %v1176, %v1196
      %v1216 = vmul.f32 %v1177, %v1196
      %v1217 = vmul.f32 %v1178, %v1196
      %v1218 = vmul.f32 %v1179, %v1196
      %v1219 = vmul.f32 %v1180, %v1196
      %v1220 = vmul.f32 %v1181, %v1196
      %v1221 = vmul.f32 %v1182, %v1196
      %v1222 = vmul.f32 %v1183, %v1196
      %v1223 = vmul.f32 %v1184, %v1196
      %v1224 = vmul.f32 %v1185, %v1196
      %v1225 = vmul.f32 %v1186, %v1196
      %v1226 = vmul.f32 %v1187, %v1196
      %v1227 = vmul.f32 %v1188, %v1196
      %v1228 = vmul.f32 %v1189, %v1196
      %v1229 = vmul.f32 %v1190, %v1196
      %v1230 = vmul.f32 %v1191, %v1196
      %v1231 = vmul.f32 %v1192, %v1196
      %v1232 = vmul.f32 %v1193, %v1196
      %v1233 = vmul.f32 %v1194, %v1196
      %v1234 = vmul.f32 %v1195, %v1196
      %v1235 = vperm.slane %v239, 2
      %v1236 = vadd.f32 %v1197, %v1235
      %v1237 = vadd.f32 %v1198, %v1235
      %v1238 = vadd.f32 %v1199, %v1235
      %v1239 = vadd.f32 %v1200, %v1235
      %v1240 = vadd.f32 %v1201, %v1235
      %v1241 = vadd.f32 %v1202, %v1235
      %v1242 = vadd.f32 %v1203, %v1235
      %v1243 = vadd.f32 %v1204, %v1235
      %v1244 = vadd.f32 %v1205, %v1235
      %v1245 = vadd.f32 %v1206, %v1235
      %v1246 = vadd.f32 %v1207, %v1235
      %v1247 = vadd.f32 %v1208, %v1235
      %v1248 = vadd.f32 %v1209, %v1235
      %v1249 = vadd.f32 %v1210, %v1235
      %v1250 = vadd.f32 %v1211, %v1235
      %v1251 = vadd.f32 %v1212, %v1235
      %v1252 = vadd.f32 %v1213, %v1235
      %v1253 = vadd.f32 %v1214, %v1235
      %v1254 = vadd.f32 %v1215, %v1235
      %v1255 = vadd.f32 %v1216, %v1235
      %v1256 = vadd.f32 %v1217, %v1235
      %v1257 = vadd.f32 %v1218, %v1235
      %v1258 = vadd.f32 %v1219, %v1235
      %v1259 = vadd.f32 %v1220, %v1235
      %v1260 = vadd.f32 %v1221, %v1235
      %v1261 = vadd.f32 %v1222, %v1235
      %v1262 = vadd.f32 %v1223, %v1235
      %v1263 = vadd.f32 %v1224, %v1235
      %v1264 = vadd.f32 %v1225, %v1235
      %v1265 = vadd.f32 %v1226, %v1235
      %v1266 = vadd.f32 %v1227, %v1235
      %v1267 = vadd.f32 %v1228, %v1235
      %v1268 = vadd.f32 %v1229, %v1235
      %v1269 = vadd.f32 %v1230, %v1235
      %v1270 = vadd.f32 %v1231, %v1235
      %v1271 = vadd.f32 %v1232, %v1235
      %v1272 = vadd.f32 %v1233, %v1235
      %v1273 = vadd.f32 %v1234, %v1235
      %vm1274 = vcmp.ge.f32.partialorder %v1236, 0.0
      %vm1275 = vcmp.ge.f32.partialorder %v1237, 0.0
      %vm1276 = vcmp.ge.f32.partialorder %v1238, 0.0
      %vm1277 = vcmp.ge.f32.partialorder %v1239, 0.0
      %vm1278 = vcmp.ge.f32.partialorder %v1240, 0.0
      %vm1279 = vcmp.ge.f32.partialorder %v1241, 0.0
      %vm1280 = vcmp.ge.f32.partialorder %v1242, 0.0
      %vm1281 = vcmp.ge.f32.partialorder %v1243, 0.0
      %vm1282 = vcmp.ge.f32.partialorder %v1244, 0.0
      %vm1283 = vcmp.ge.f32.partialorder %v1245, 0.0
      %vm1284 = vcmp.ge.f32.partialorder %v1246, 0.0
      %vm1285 = vcmp.ge.f32.partialorder %v1247, 0.0
      %vm1286 = vcmp.ge.f32.partialorder %v1248, 0.0
      %vm1287 = vcmp.ge.f32.partialorder %v1249, 0.0
      %vm1288 = vcmp.ge.f32.partialorder %v1250, 0.0
      %vm1289 = vcmp.ge.f32.partialorder %v1251, 0.0
      %vm1290 = vcmp.ge.f32.partialorder %v1252, 0.0
      %vm1291 = vcmp.ge.f32.partialorder %v1253, 0.0
      %vm1292 = vcmp.ge.f32.partialorder %v1254, 0.0
      %vm1293 = vcmp.ge.f32.partialorder %v1255, 0.0
      %vm1294 = vcmp.ge.f32.partialorder %v1256, 0.0
      %vm1295 = vcmp.ge.f32.partialorder %v1257, 0.0
      %vm1296 = vcmp.ge.f32.partialorder %v1258, 0.0
      %vm1297 = vcmp.ge.f32.partialorder %v1259, 0.0
      %vm1298 = vcmp.ge.f32.partialorder %v1260, 0.0
      %vm1299 = vcmp.ge.f32.partialorder %v1261, 0.0
      %vm1300 = vcmp.ge.f32.partialorder %v1262, 0.0
      %vm1301 = vcmp.ge.f32.partialorder %v1263, 0.0
      %vm1302 = vcmp.ge.f32.partialorder %v1264, 0.0
      %vm1303 = vcmp.ge.f32.partialorder %v1265, 0.0
      %vm1304 = vcmp.ge.f32.partialorder %v1266, 0.0
      %vm1305 = vcmp.ge.f32.partialorder %v1267, 0.0
      %vm1306 = vcmp.ge.f32.partialorder %v1268, 0.0
      %vm1307 = vcmp.ge.f32.partialorder %v1269, 0.0
      %vm1308 = vcmp.ge.f32.partialorder %v1270, 0.0
      %vm1309 = vcmp.ge.f32.partialorder %v1271, 0.0
      %vm1310 = vcmp.ge.f32.partialorder %v1272, 0.0
      %vm1311 = vcmp.ge.f32.partialorder %v1273, 0.0
      %v1312 = vperm.slane %v239, 3
      %v1313 = vmul.f32 %v1312, %v1236
      %v1314 = vmul.f32 %v1312, %v1237
      %v1315 = vmul.f32 %v1312, %v1238
      %v1316 = vmul.f32 %v1312, %v1239
      %v1317 = vmul.f32 %v1312, %v1240
      %v1318 = vmul.f32 %v1312, %v1241
      %v1319 = vmul.f32 %v1312, %v1242
      %v1320 = vmul.f32 %v1312, %v1243
      %v1321 = vmul.f32 %v1312, %v1244
      %v1322 = vmul.f32 %v1312, %v1245
      %v1323 = vmul.f32 %v1312, %v1246
      %v1324 = vmul.f32 %v1312, %v1247
      %v1325 = vmul.f32 %v1312, %v1248
      %v1326 = vmul.f32 %v1312, %v1249
      %v1327 = vmul.f32 %v1312, %v1250
      %v1328 = vmul.f32 %v1312, %v1251
      %v1329 = vmul.f32 %v1312, %v1252
      %v1330 = vmul.f32 %v1312, %v1253
      %v1331 = vmul.f32 %v1312, %v1254
      %v1332 = vmul.f32 %v1312, %v1255
      %v1333 = vmul.f32 %v1312, %v1256
      %v1334 = vmul.f32 %v1312, %v1257
      %v1335 = vmul.f32 %v1312, %v1258
      %v1336 = vmul.f32 %v1312, %v1259
      %v1337 = vmul.f32 %v1312, %v1260
      %v1338 = vmul.f32 %v1312, %v1261
      %v1339 = vmul.f32 %v1312, %v1262
      %v1340 = vmul.f32 %v1312, %v1263
      %v1341 = vmul.f32 %v1312, %v1264
      %v1342 = vmul.f32 %v1312, %v1265
      %v1343 = vmul.f32 %v1312, %v1266
      %v1344 = vmul.f32 %v1312, %v1267
      %v1345 = vmul.f32 %v1312, %v1268
      %v1346 = vmul.f32 %v1312, %v1269
      %v1347 = vmul.f32 %v1312, %v1270
      %v1348 = vmul.f32 %v1312, %v1271
      %v1349 = vmul.f32 %v1312, %v1272
      %v1350 = vmul.f32 %v1312, %v1273
      %v1351 = vsel %vm1274, %v1236, %v1313
      %v1352 = vsel %vm1275, %v1237, %v1314
      %v1353 = vsel %vm1276, %v1238, %v1315
      %v1354 = vsel %vm1277, %v1239, %v1316
      %v1355 = vsel %vm1278, %v1240, %v1317
      %v1356 = vsel %vm1279, %v1241, %v1318
      %v1357 = vsel %vm1280, %v1242, %v1319
      %v1358 = vsel %vm1281, %v1243, %v1320
      %v1359 = vsel %vm1282, %v1244, %v1321
      %v1360 = vsel %vm1283, %v1245, %v1322
      %v1361 = vsel %vm1284, %v1246, %v1323
      %v1362 = vsel %vm1285, %v1247, %v1324
      %v1363 = vsel %vm1286, %v1248, %v1325
      %v1364 = vsel %vm1287, %v1249, %v1326
      %v1365 = vsel %vm1288, %v1250, %v1327
      %v1366 = vsel %vm1289, %v1251, %v1328
      %v1367 = vsel %vm1290, %v1252, %v1329
      %v1368 = vsel %vm1291, %v1253, %v1330
      %v1369 = vsel %vm1292, %v1254, %v1331
      %v1370 = vsel %vm1293, %v1255, %v1332
      %v1371 = vsel %vm1294, %v1256, %v1333
      %v1372 = vsel %vm1295, %v1257, %v1334
      %v1373 = vsel %vm1296, %v1258, %v1335
      %v1374 = vsel %vm1297, %v1259, %v1336
      %v1375 = vsel %vm1298, %v1260, %v1337
      %v1376 = vsel %vm1299, %v1261, %v1338
      %v1377 = vsel %vm1300, %v1262, %v1339
      %v1378 = vsel %vm1301, %v1263, %v1340
      %v1379 = vsel %vm1302, %v1264, %v1341
      %v1380 = vsel %vm1303, %v1265, %v1342
      %v1381 = vsel %vm1304, %v1266, %v1343
      %v1382 = vsel %vm1305, %v1267, %v1344
      %v1383 = vsel %vm1306, %v1268, %v1345
      %v1384 = vsel %vm1307, %v1269, %v1346
      %v1385 = vsel %vm1308, %v1270, %v1347
      %v1386 = vsel %vm1309, %v1271, %v1348
      %v1387 = vsel %vm1310, %v1272, %v1349
      %v1388 = vsel %vm1311, %v1273, %v1350
      %v1389 = vpack.c.bf16 %v1352, %v1351
      %v1390 = vpack.c.bf16 %v1354, %v1353
      %v1391 = vpack.c.bf16 %v1356, %v1355
      %v1392 = vpack.c.bf16 %v1358, %v1357
      %v1393 = vpack.c.bf16 %v1360, %v1359
      %v1394 = vpack.c.bf16 %v1362, %v1361
      %v1395 = vpack.c.bf16 %v1364, %v1363
      %v1396 = vpack.c.bf16 %v1366, %v1365
      %v1397 = vpack.c.bf16 %v1368, %v1367
      %v1398 = vpack.c.bf16 %v1370, %v1369
      %v1399 = vpack.c.bf16 %v1372, %v1371
      %v1400 = vpack.c.bf16 %v1374, %v1373
      %v1401 = vpack.c.bf16 %v1376, %v1375
      %v1402 = vpack.c.bf16 %v1378, %v1377
      %v1403 = vpack.c.bf16 %v1380, %v1379
      %v1404 = vpack.c.bf16 %v1382, %v1381
      %v1405 = vpack.c.bf16 %v1384, %v1383
      %v1406 = vpack.c.bf16 %v1386, %v1385
      %v1407 = vpack.c.bf16 %v1388, %v1387
      %v1408 = vld [vmem:[%s2] sm:$0xf]
      %v1409 = vld [vmem:[%s2 + $0x4] sm:$0xf]
      %v1410 = vld [vmem:[%s2 + $0x8] sm:$0xf]
      %v1411 = vld [vmem:[%s2 + $0xc] sm:$0xf]
      %v1412 = vld [vmem:[%s2 + $0x10] sm:$0xf]
      %v1413 = vld [vmem:[%s2 + $0x14] sm:$0xf]
      %v1414 = vld [vmem:[%s2 + $0x18] sm:$0xf]
      %v1415 = vld [vmem:[%s2 + $0x1c] sm:$0xf]
      %v1416 = vld [vmem:[%s2 + $0x20] sm:$0xf]
      %v1417 = vld [vmem:[%s2 + $0x24] sm:$0xf]
      %v1418 = vld [vmem:[%s2 + $0x28] sm:$0xf]
      %v1419 = vld [vmem:[%s2 + $0x2c] sm:$0xf]
      %v1420 = vld [vmem:[%s2 + $0x30] sm:$0xf]
      %v1421 = vld [vmem:[%s2 + $0x34] sm:$0xf]
      %v1422 = vld [vmem:[%s2 + $0x38] sm:$0xf]
      %v1423 = vld [vmem:[%s2 + $0x3c] sm:$0xf]
      %v1424 = vperm.slane %v239, 4
      %v1441 = vunpack.c.l.b16 %v1408
      %v1442 = vunpack.c.l.b16 %v1409
      %v1443 = vunpack.c.l.b16 %v1410
      %v1444 = vunpack.c.l.b16 %v1411
      %v1445 = vunpack.c.l.b16 %v1412
      %v1446 = vunpack.c.l.b16 %v1413
      %v1447 = vunpack.c.l.b16 %v1414
      %v1448 = vunpack.c.l.b16 %v1415
      %v1449 = vunpack.c.l.b16 %v1416
      %v1450 = vunpack.c.l.b16 %v1417
      %v1451 = vunpack.c.l.b16 %v1418
      %v1452 = vunpack.c.l.b16 %v1419
      %v1453 = vunpack.c.l.b16 %v1420
      %v1454 = vunpack.c.l.b16 %v1421
      %v1455 = vunpack.c.l.b16 %v1422
      %v1456 = vunpack.c.l.b16 %v1423
      %v1457 = vpack.c.b16 %v1442, %v1441
      %v1458 = vpack.c.b16 %v1444, %v1443
      %v1459 = vpack.c.b16 %v1446, %v1445
      %v1460 = vpack.c.b16 %v1448, %v1447
      %v1461 = vpack.c.b16 %v1450, %v1449
      %v1462 = vpack.c.b16 %v1452, %v1451
      %v1463 = vpack.c.b16 %v1454, %v1453
      %v1464 = vpack.c.b16 %v1456, %v1455
      %1473 = vmatpush.bf16.msra.mxu0 %v1464
      %1474 = vmatpush.bf16.msra.mxu0 %v1463
      %1475 = vmatpush.bf16.msra.mxu0 %v1462
      %1476 = vmatpush.bf16.msra.mxu0 %v1461
      %1477 = vmatpush.bf16.msra.mxu0 %v1460
      %1478 = vmatpush.bf16.msra.mxu0 %v1459
      %1479 = vmatpush.bf16.msra.mxu0 %v1458
      %1480 = vmatpush.bf16.msra.mxu0 %v1457
      %1481 = vmatmul.bf16.gmra.mxu0 %v1389
      %v1482 = vpop.f32.mrf.mxu0
      %v1483 = vadd.f32 %v1424, %v1482
      %v1484 = vpop.f32.mrf.mxu0
      %v1485 = vadd.f32 %v1424, %v1484
      %1486 = vmatmul.bf16.gmra.mxu0 %v1390
      %v1487 = vpop.f32.mrf.mxu0
      %v1488 = vadd.f32 %v1424, %v1487
      %v1489 = vpop.f32.mrf.mxu0
      %v1490 = vadd.f32 %v1424, %v1489
      %1491 = vmatmul.bf16.gmra.mxu0 %v1391
      %v1492 = vpop.f32.mrf.mxu0
      %v1493 = vadd.f32 %v1424, %v1492
      %v1494 = vpop.f32.mrf.mxu0
      %v1495 = vadd.f32 %v1424, %v1494
      %1496 = vmatmul.bf16.gmra.mxu0 %v1392
      %v1497 = vpop.f32.mrf.mxu0
      %v1498 = vadd.f32 %v1424, %v1497
      %v1499 = vpop.f32.mrf.mxu0
      %v1500 = vadd.f32 %v1424, %v1499
      %1501 = vmatmul.bf16.gmra.mxu0 %v1393
      %v1502 = vpop.f32.mrf.mxu0
      %v1503 = vadd.f32 %v1424, %v1502
      %v1504 = vpop.f32.mrf.mxu0
      %v1505 = vadd.f32 %v1424, %v1504
      %1506 = vmatmul.bf16.gmra.mxu0 %v1394
      %v1507 = vpop.f32.mrf.mxu0
      %v1508 = vadd.f32 %v1424, %v1507
      %v1509 = vpop.f32.mrf.mxu0
      %v1510 = vadd.f32 %v1424, %v1509
      %1511 = vmatmul.bf16.gmra.mxu0 %v1395
      %v1512 = vpop.f32.mrf.mxu0
      %v1513 = vadd.f32 %v1424, %v1512
      %v1514 = vpop.f32.mrf.mxu0
      %v1515 = vadd.f32 %v1424, %v1514
      %1516 = vmatmul.bf16.gmra.mxu0 %v1396
      %v1517 = vpop.f32.mrf.mxu0
      %v1518 = vadd.f32 %v1424, %v1517
      %v1519 = vpop.f32.mrf.mxu0
      %v1520 = vadd.f32 %v1424, %v1519
      %1521 = vmatmul.bf16.gmra.mxu0 %v1397
      %v1522 = vpop.f32.mrf.mxu0
      %v1523 = vadd.f32 %v1424, %v1522
      %v1524 = vpop.f32.mrf.mxu0
      %v1525 = vadd.f32 %v1424, %v1524
      %1526 = vmatmul.bf16.gmra.mxu0 %v1398
      %v1527 = vpop.f32.mrf.mxu0
      %v1528 = vadd.f32 %v1424, %v1527
      %v1529 = vpop.f32.mrf.mxu0
      %v1530 = vadd.f32 %v1424, %v1529
      %1531 = vmatmul.bf16.gmra.mxu0 %v1399
      %v1532 = vpop.f32.mrf.mxu0
      %v1533 = vadd.f32 %v1424, %v1532
      %v1534 = vpop.f32.mrf.mxu0
      %v1535 = vadd.f32 %v1424, %v1534
      %1536 = vmatmul.bf16.gmra.mxu0 %v1400
      %v1537 = vpop.f32.mrf.mxu0
      %v1538 = vadd.f32 %v1424, %v1537
      %v1539 = vpop.f32.mrf.mxu0
      %v1540 = vadd.f32 %v1424, %v1539
      %1541 = vmatmul.bf16.gmra.mxu0 %v1401
      %v1542 = vpop.f32.mrf.mxu0
      %v1543 = vadd.f32 %v1424, %v1542
      %v1544 = vpop.f32.mrf.mxu0
      %v1545 = vadd.f32 %v1424, %v1544
      %1546 = vmatmul.bf16.gmra.mxu0 %v1402
      %v1547 = vpop.f32.mrf.mxu0
      %v1548 = vadd.f32 %v1424, %v1547
      %v1549 = vpop.f32.mrf.mxu0
      %v1550 = vadd.f32 %v1424, %v1549
      %1551 = vmatmul.bf16.gmra.mxu0 %v1403
      %v1552 = vpop.f32.mrf.mxu0
      %v1553 = vadd.f32 %v1424, %v1552
      %v1554 = vpop.f32.mrf.mxu0
      %v1555 = vadd.f32 %v1424, %v1554
      %1556 = vmatmul.bf16.gmra.mxu0 %v1404
      %v1557 = vpop.f32.mrf.mxu0
      %v1558 = vadd.f32 %v1424, %v1557
      %v1559 = vpop.f32.mrf.mxu0
      %v1560 = vadd.f32 %v1424, %v1559
      %1561 = vmatmul.bf16.gmra.mxu0 %v1405
      %v1562 = vpop.f32.mrf.mxu0
      %v1563 = vadd.f32 %v1424, %v1562
      %v1564 = vpop.f32.mrf.mxu0
      %v1565 = vadd.f32 %v1424, %v1564
      %1566 = vmatmul.bf16.gmra.mxu0 %v1406
      %v1567 = vpop.f32.mrf.mxu0
      %v1568 = vadd.f32 %v1424, %v1567
      %v1569 = vpop.f32.mrf.mxu0
      %v1570 = vadd.f32 %v1424, %v1569
      %1571 = vmatmul.bf16.gmra.mxu0 %v1407
      %v1572 = vpop.f32.mrf.mxu0
      %v1573 = vadd.f32 %v1424, %v1572
      %v1574 = vpop.f32.mrf.mxu0
      %v1575 = vadd.f32 %v1424, %v1574
      %1576 = vdwg.mxu0
      %1577 = vadd.xlane.f32.xlu0 %v1483
      %v1578 = vpop.xlane.xlu0 %1577
      %1579 = vadd.xlane.f32.xlu0 %v1485
      %v1580 = vpop.xlane.xlu0 %1579
      %1581 = vadd.xlane.f32.xlu0 %v1488
      %v1582 = vpop.xlane.xlu0 %1581
      %1583 = vadd.xlane.f32.xlu0 %v1490
      %v1584 = vpop.xlane.xlu0 %1583
      %1585 = vadd.xlane.f32.xlu0 %v1493
      %v1586 = vpop.xlane.xlu0 %1585
      %1587 = vadd.xlane.f32.xlu0 %v1495
      %v1588 = vpop.xlane.xlu0 %1587
      %1589 = vadd.xlane.f32.xlu0 %v1498
      %v1590 = vpop.xlane.xlu0 %1589
      %1591 = vadd.xlane.f32.xlu0 %v1500
      %v1592 = vpop.xlane.xlu0 %1591
      %1593 = vadd.xlane.f32.xlu0 %v1503
      %v1594 = vpop.xlane.xlu0 %1593
      %1595 = vadd.xlane.f32.xlu0 %v1505
      %v1596 = vpop.xlane.xlu0 %1595
      %1597 = vadd.xlane.f32.xlu0 %v1508
      %v1598 = vpop.xlane.xlu0 %1597
      %1599 = vadd.xlane.f32.xlu0 %v1510
      %v1600 = vpop.xlane.xlu0 %1599
      %1601 = vadd.xlane.f32.xlu0 %v1513
      %v1602 = vpop.xlane.xlu0 %1601
      %1603 = vadd.xlane.f32.xlu0 %v1515
      %v1604 = vpop.xlane.xlu0 %1603
      %1605 = vadd.xlane.f32.xlu0 %v1518
      %v1606 = vpop.xlane.xlu0 %1605
      %1607 = vadd.xlane.f32.xlu0 %v1520
      %v1608 = vpop.xlane.xlu0 %1607
      %1609 = vadd.xlane.f32.xlu0 %v1523
      %v1610 = vpop.xlane.xlu0 %1609
      %1611 = vadd.xlane.f32.xlu0 %v1525
      %v1612 = vpop.xlane.xlu0 %1611
      %1613 = vadd.xlane.f32.xlu0 %v1528
      %v1614 = vpop.xlane.xlu0 %1613
      %1615 = vadd.xlane.f32.xlu0 %v1530
      %v1616 = vpop.xlane.xlu0 %1615
      %1617 = vadd.xlane.f32.xlu0 %v1533
      %v1618 = vpop.xlane.xlu0 %1617
      %1619 = vadd.xlane.f32.xlu0 %v1535
      %v1620 = vpop.xlane.xlu0 %1619
      %1621 = vadd.xlane.f32.xlu0 %v1538
      %v1622 = vpop.xlane.xlu0 %1621
      %1623 = vadd.xlane.f32.xlu0 %v1540
      %v1624 = vpop.xlane.xlu0 %1623
      %1625 = vadd.xlane.f32.xlu0 %v1543
      %v1626 = vpop.xlane.xlu0 %1625
      %1627 = vadd.xlane.f32.xlu0 %v1545
      %v1628 = vpop.xlane.xlu0 %1627
      %1629 = vadd.xlane.f32.xlu0 %v1548
      %v1630 = vpop.xlane.xlu0 %1629
      %1631 = vadd.xlane.f32.xlu0 %v1550
      %v1632 = vpop.xlane.xlu0 %1631
      %1633 = vadd.xlane.f32.xlu0 %v1553
      %v1634 = vpop.xlane.xlu0 %1633
      %1635 = vadd.xlane.f32.xlu0 %v1555
      %v1636 = vpop.xlane.xlu0 %1635
      %1637 = vadd.xlane.f32.xlu0 %v1558
      %v1638 = vpop.xlane.xlu0 %1637
      %1639 = vadd.xlane.f32.xlu0 %v1560
      %v1640 = vpop.xlane.xlu0 %1639
      %1641 = vadd.xlane.f32.xlu0 %v1563
      %v1642 = vpop.xlane.xlu0 %1641
      %1643 = vadd.xlane.f32.xlu0 %v1565
      %v1644 = vpop.xlane.xlu0 %1643
      %1645 = vadd.xlane.f32.xlu0 %v1568
      %v1646 = vpop.xlane.xlu0 %1645
      %1647 = vadd.xlane.f32.xlu0 %v1570
      %v1648 = vpop.xlane.xlu0 %1647
      %1649 = vadd.xlane.f32.xlu0 %v1573
      %v1650 = vpop.xlane.xlu0 %1649
      %1651 = vadd.xlane.f32.xlu0 %v1575
      %v1652 = vpop.xlane.xlu0 %1651
      %v1653 = vmul.f32 %v1578, %v511
      %v1654 = vmul.f32 %v1580, %v511
      %v1655 = vmul.f32 %v1582, %v511
      %v1656 = vmul.f32 %v1584, %v511
      %v1657 = vmul.f32 %v1586, %v511
      %v1658 = vmul.f32 %v1588, %v511
      %v1659 = vmul.f32 %v1590, %v511
      %v1660 = vmul.f32 %v1592, %v511
      %v1661 = vmul.f32 %v1594, %v511
      %v1662 = vmul.f32 %v1596, %v511
      %v1663 = vmul.f32 %v1598, %v511
      %v1664 = vmul.f32 %v1600, %v511
      %v1665 = vmul.f32 %v1602, %v511
      %v1666 = vmul.f32 %v1604, %v511
      %v1667 = vmul.f32 %v1606, %v511
      %v1668 = vmul.f32 %v1608, %v511
      %v1669 = vmul.f32 %v1610, %v511
      %v1670 = vmul.f32 %v1612, %v511
      %v1671 = vmul.f32 %v1614, %v511
      %v1672 = vmul.f32 %v1616, %v511
      %v1673 = vmul.f32 %v1618, %v511
      %v1674 = vmul.f32 %v1620, %v511
      %v1675 = vmul.f32 %v1622, %v511
      %v1676 = vmul.f32 %v1624, %v511
      %v1677 = vmul.f32 %v1626, %v511
      %v1678 = vmul.f32 %v1628, %v511
      %v1679 = vmul.f32 %v1630, %v511
      %v1680 = vmul.f32 %v1632, %v511
      %v1681 = vmul.f32 %v1634, %v511
      %v1682 = vmul.f32 %v1636, %v511
      %v1683 = vmul.f32 %v1638, %v511
      %v1684 = vmul.f32 %v1640, %v511
      %v1685 = vmul.f32 %v1642, %v511
      %v1686 = vmul.f32 %v1644, %v511
      %v1687 = vmul.f32 %v1646, %v511
      %v1688 = vmul.f32 %v1648, %v511
      %v1689 = vmul.f32 %v1650, %v511
      %v1690 = vmul.f32 %v1652, %v511
      %v1691 = vsub.f32 %v1483, %v1653
      %v1692 = vsub.f32 %v1485, %v1654
      %v1693 = vsub.f32 %v1488, %v1655
      %v1694 = vsub.f32 %v1490, %v1656
      %v1695 = vsub.f32 %v1493, %v1657
      %v1696 = vsub.f32 %v1495, %v1658
      %v1697 = vsub.f32 %v1498, %v1659
      %v1698 = vsub.f32 %v1500, %v1660
      %v1699 = vsub.f32 %v1503, %v1661
      %v1700 = vsub.f32 %v1505, %v1662
      %v1701 = vsub.f32 %v1508, %v1663
      %v1702 = vsub.f32 %v1510, %v1664
      %v1703 = vsub.f32 %v1513, %v1665
      %v1704 = vsub.f32 %v1515, %v1666
      %v1705 = vsub.f32 %v1518, %v1667
      %v1706 = vsub.f32 %v1520, %v1668
      %v1707 = vsub.f32 %v1523, %v1669
      %v1708 = vsub.f32 %v1525, %v1670
      %v1709 = vsub.f32 %v1528, %v1671
      %v1710 = vsub.f32 %v1530, %v1672
      %v1711 = vsub.f32 %v1533, %v1673
      %v1712 = vsub.f32 %v1535, %v1674
      %v1713 = vsub.f32 %v1538, %v1675
      %v1714 = vsub.f32 %v1540, %v1676
      %v1715 = vsub.f32 %v1543, %v1677
      %v1716 = vsub.f32 %v1545, %v1678
      %v1717 = vsub.f32 %v1548, %v1679
      %v1718 = vsub.f32 %v1550, %v1680
      %v1719 = vsub.f32 %v1553, %v1681
      %v1720 = vsub.f32 %v1555, %v1682
      %v1721 = vsub.f32 %v1558, %v1683
      %v1722 = vsub.f32 %v1560, %v1684
      %v1723 = vsub.f32 %v1563, %v1685
      %v1724 = vsub.f32 %v1565, %v1686
      %v1725 = vsub.f32 %v1568, %v1687
      %v1726 = vsub.f32 %v1570, %v1688
      %v1727 = vsub.f32 %v1573, %v1689
      %v1728 = vsub.f32 %v1575, %v1690
      %v1729 = vmul.f32 %v1691, %v1691
      %v1730 = vmul.f32 %v1692, %v1692
      %v1731 = vmul.f32 %v1693, %v1693
      %v1732 = vmul.f32 %v1694, %v1694
      %v1733 = vmul.f32 %v1695, %v1695
      %v1734 = vmul.f32 %v1696, %v1696
      %v1735 = vmul.f32 %v1697, %v1697
      %v1736 = vmul.f32 %v1698, %v1698
      %v1737 = vmul.f32 %v1699, %v1699
      %v1738 = vmul.f32 %v1700, %v1700
      %v1739 = vmul.f32 %v1701, %v1701
      %v1740 = vmul.f32 %v1702, %v1702
      %v1741 = vmul.f32 %v1703, %v1703
      %v1742 = vmul.f32 %v1704, %v1704
      %v1743 = vmul.f32 %v1705, %v1705
      %v1744 = vmul.f32 %v1706, %v1706
      %v1745 = vmul.f32 %v1707, %v1707
      %v1746 = vmul.f32 %v1708, %v1708
      %v1747 = vmul.f32 %v1709, %v1709
      %v1748 = vmul.f32 %v1710, %v1710
      %v1749 = vmul.f32 %v1711, %v1711
      %v1750 = vmul.f32 %v1712, %v1712
      %v1751 = vmul.f32 %v1713, %v1713
      %v1752 = vmul.f32 %v1714, %v1714
      %v1753 = vmul.f32 %v1715, %v1715
      %v1754 = vmul.f32 %v1716, %v1716
      %v1755 = vmul.f32 %v1717, %v1717
      %v1756 = vmul.f32 %v1718, %v1718
      %v1757 = vmul.f32 %v1719, %v1719
      %v1758 = vmul.f32 %v1720, %v1720
      %v1759 = vmul.f32 %v1721, %v1721
      %v1760 = vmul.f32 %v1722, %v1722
      %v1761 = vmul.f32 %v1723, %v1723
      %v1762 = vmul.f32 %v1724, %v1724
      %v1763 = vmul.f32 %v1725, %v1725
      %v1764 = vmul.f32 %v1726, %v1726
      %v1765 = vmul.f32 %v1727, %v1727
      %v1766 = vmul.f32 %v1728, %v1728
      %1767 = vadd.xlane.f32.xlu0 %v1729
      %v1768 = vpop.xlane.xlu0 %1767
      %1769 = vadd.xlane.f32.xlu0 %v1730
      %v1770 = vpop.xlane.xlu0 %1769
      %1771 = vadd.xlane.f32.xlu0 %v1731
      %v1772 = vpop.xlane.xlu0 %1771
      %1773 = vadd.xlane.f32.xlu0 %v1732
      %v1774 = vpop.xlane.xlu0 %1773
      %1775 = vadd.xlane.f32.xlu0 %v1733
      %v1776 = vpop.xlane.xlu0 %1775
      %1777 = vadd.xlane.f32.xlu0 %v1734
      %v1778 = vpop.xlane.xlu0 %1777
      %1779 = vadd.xlane.f32.xlu0 %v1735
      %v1780 = vpop.xlane.xlu0 %1779
      %1781 = vadd.xlane.f32.xlu0 %v1736
      %v1782 = vpop.xlane.xlu0 %1781
      %1783 = vadd.xlane.f32.xlu0 %v1737
      %v1784 = vpop.xlane.xlu0 %1783
      %1785 = vadd.xlane.f32.xlu0 %v1738
      %v1786 = vpop.xlane.xlu0 %1785
      %1787 = vadd.xlane.f32.xlu0 %v1739
      %v1788 = vpop.xlane.xlu0 %1787
      %1789 = vadd.xlane.f32.xlu0 %v1740
      %v1790 = vpop.xlane.xlu0 %1789
      %1791 = vadd.xlane.f32.xlu0 %v1741
      %v1792 = vpop.xlane.xlu0 %1791
      %1793 = vadd.xlane.f32.xlu0 %v1742
      %v1794 = vpop.xlane.xlu0 %1793
      %1795 = vadd.xlane.f32.xlu0 %v1743
      %v1796 = vpop.xlane.xlu0 %1795
      %1797 = vadd.xlane.f32.xlu0 %v1744
      %v1798 = vpop.xlane.xlu0 %1797
      %1799 = vadd.xlane.f32.xlu0 %v1745
      %v1800 = vpop.xlane.xlu0 %1799
      %1801 = vadd.xlane.f32.xlu0 %v1746
      %v1802 = vpop.xlane.xlu0 %1801
      %1803 = vadd.xlane.f32.xlu0 %v1747
      %v1804 = vpop.xlane.xlu0 %1803
      %1805 = vadd.xlane.f32.xlu0 %v1748
      %v1806 = vpop.xlane.xlu0 %1805
      %1807 = vadd.xlane.f32.xlu0 %v1749
      %v1808 = vpop.xlane.xlu0 %1807
      %1809 = vadd.xlane.f32.xlu0 %v1750
      %v1810 = vpop.xlane.xlu0 %1809
      %1811 = vadd.xlane.f32.xlu0 %v1751
      %v1812 = vpop.xlane.xlu0 %1811
      %1813 = vadd.xlane.f32.xlu0 %v1752
      %v1814 = vpop.xlane.xlu0 %1813
      %1815 = vadd.xlane.f32.xlu0 %v1753
      %v1816 = vpop.xlane.xlu0 %1815
      %1817 = vadd.xlane.f32.xlu0 %v1754
      %v1818 = vpop.xlane.xlu0 %1817
      %1819 = vadd.xlane.f32.xlu0 %v1755
      %v1820 = vpop.xlane.xlu0 %1819
      %1821 = vadd.xlane.f32.xlu0 %v1756
      %v1822 = vpop.xlane.xlu0 %1821
      %1823 = vadd.xlane.f32.xlu0 %v1757
      %v1824 = vpop.xlane.xlu0 %1823
      %1825 = vadd.xlane.f32.xlu0 %v1758
      %v1826 = vpop.xlane.xlu0 %1825
      %1827 = vadd.xlane.f32.xlu0 %v1759
      %v1828 = vpop.xlane.xlu0 %1827
      %1829 = vadd.xlane.f32.xlu0 %v1760
      %v1830 = vpop.xlane.xlu0 %1829
      %1831 = vadd.xlane.f32.xlu0 %v1761
      %v1832 = vpop.xlane.xlu0 %1831
      %1833 = vadd.xlane.f32.xlu0 %v1762
      %v1834 = vpop.xlane.xlu0 %1833
      %1835 = vadd.xlane.f32.xlu0 %v1763
      %v1836 = vpop.xlane.xlu0 %1835
      %1837 = vadd.xlane.f32.xlu0 %v1764
      %v1838 = vpop.xlane.xlu0 %1837
      %1839 = vadd.xlane.f32.xlu0 %v1765
      %v1840 = vpop.xlane.xlu0 %1839
      %1841 = vadd.xlane.f32.xlu0 %v1766
      %v1842 = vpop.xlane.xlu0 %1841
      %v1843 = vmul.f32 %v1768, %v511
      %v1844 = vmul.f32 %v1770, %v511
      %v1845 = vmul.f32 %v1772, %v511
      %v1846 = vmul.f32 %v1774, %v511
      %v1847 = vmul.f32 %v1776, %v511
      %v1848 = vmul.f32 %v1778, %v511
      %v1849 = vmul.f32 %v1780, %v511
      %v1850 = vmul.f32 %v1782, %v511
      %v1851 = vmul.f32 %v1784, %v511
      %v1852 = vmul.f32 %v1786, %v511
      %v1853 = vmul.f32 %v1788, %v511
      %v1854 = vmul.f32 %v1790, %v511
      %v1855 = vmul.f32 %v1792, %v511
      %v1856 = vmul.f32 %v1794, %v511
      %v1857 = vmul.f32 %v1796, %v511
      %v1858 = vmul.f32 %v1798, %v511
      %v1859 = vmul.f32 %v1800, %v511
      %v1860 = vmul.f32 %v1802, %v511
      %v1861 = vmul.f32 %v1804, %v511
      %v1862 = vmul.f32 %v1806, %v511
      %v1863 = vmul.f32 %v1808, %v511
      %v1864 = vmul.f32 %v1810, %v511
      %v1865 = vmul.f32 %v1812, %v511
      %v1866 = vmul.f32 %v1814, %v511
      %v1867 = vmul.f32 %v1816, %v511
      %v1868 = vmul.f32 %v1818, %v511
      %v1869 = vmul.f32 %v1820, %v511
      %v1870 = vmul.f32 %v1822, %v511
      %v1871 = vmul.f32 %v1824, %v511
      %v1872 = vmul.f32 %v1826, %v511
      %v1873 = vmul.f32 %v1828, %v511
      %v1874 = vmul.f32 %v1830, %v511
      %v1875 = vmul.f32 %v1832, %v511
      %v1876 = vmul.f32 %v1834, %v511
      %v1877 = vmul.f32 %v1836, %v511
      %v1878 = vmul.f32 %v1838, %v511
      %v1879 = vmul.f32 %v1840, %v511
      %v1880 = vmul.f32 %v1842, %v511
      %v1881 = vadd.f32 %v1843, 1e-05
      %v1882 = vadd.f32 %v1844, 1e-05
      %v1883 = vadd.f32 %v1845, 1e-05
      %v1884 = vadd.f32 %v1846, 1e-05
      %v1885 = vadd.f32 %v1847, 1e-05
      %v1886 = vadd.f32 %v1848, 1e-05
      %v1887 = vadd.f32 %v1849, 1e-05
      %v1888 = vadd.f32 %v1850, 1e-05
      %v1889 = vadd.f32 %v1851, 1e-05
      %v1890 = vadd.f32 %v1852, 1e-05
      %v1891 = vadd.f32 %v1853, 1e-05
      %v1892 = vadd.f32 %v1854, 1e-05
      %v1893 = vadd.f32 %v1855, 1e-05
      %v1894 = vadd.f32 %v1856, 1e-05
      %v1895 = vadd.f32 %v1857, 1e-05
      %v1896 = vadd.f32 %v1858, 1e-05
      %v1897 = vadd.f32 %v1859, 1e-05
      %v1898 = vadd.f32 %v1860, 1e-05
      %v1899 = vadd.f32 %v1861, 1e-05
      %v1900 = vadd.f32 %v1862, 1e-05
      %v1901 = vadd.f32 %v1863, 1e-05
      %v1902 = vadd.f32 %v1864, 1e-05
      %v1903 = vadd.f32 %v1865, 1e-05
      %v1904 = vadd.f32 %v1866, 1e-05
      %v1905 = vadd.f32 %v1867, 1e-05
      %v1906 = vadd.f32 %v1868, 1e-05
      %v1907 = vadd.f32 %v1869, 1e-05
      %v1908 = vadd.f32 %v1870, 1e-05
      %v1909 = vadd.f32 %v1871, 1e-05
      %v1910 = vadd.f32 %v1872, 1e-05
      %v1911 = vadd.f32 %v1873, 1e-05
      %v1912 = vadd.f32 %v1874, 1e-05
      %v1913 = vadd.f32 %v1875, 1e-05
      %v1914 = vadd.f32 %v1876, 1e-05
      %v1915 = vadd.f32 %v1877, 1e-05
      %v1916 = vadd.f32 %v1878, 1e-05
      %v1917 = vadd.f32 %v1879, 1e-05
      %v1918 = vadd.f32 %v1880, 1e-05
      %v1919 = vrsqrt.pop %v1881
      %v1920 = vmul.f32 %v1919, %v1881
      %v1921 = vmul.f32 %v1920, %v1919
      %v1922 = vmul.f32 0.5, %v1921
      %v1923 = vsub.f32 1.5, %v1922
      %v1924 = vmul.f32 %v1919, %v1923
      %vm1925 = vweird.f32 %v1881
      %vm1926 = vweird.f32 %v1919
      %vm1927 = vmor %vm1925, %vm1926
      %v1928 = vsel %vm1927, %v1919, %v1924
      %v1929 = vrsqrt.pop %v1882
      %v1930 = vmul.f32 %v1929, %v1882
      %v1931 = vmul.f32 %v1930, %v1929
      %v1932 = vmul.f32 0.5, %v1931
      %v1933 = vsub.f32 1.5, %v1932
      %v1934 = vmul.f32 %v1929, %v1933
      %vm1935 = vweird.f32 %v1882
      %vm1936 = vweird.f32 %v1929
      %vm1937 = vmor %vm1935, %vm1936
      %v1938 = vsel %vm1937, %v1929, %v1934
      %v1939 = vrsqrt.pop %v1883
      %v1940 = vmul.f32 %v1939, %v1883
      %v1941 = vmul.f32 %v1940, %v1939
      %v1942 = vmul.f32 0.5, %v1941
      %v1943 = vsub.f32 1.5, %v1942
      %v1944 = vmul.f32 %v1939, %v1943
      %vm1945 = vweird.f32 %v1883
      %vm1946 = vweird.f32 %v1939
      %vm1947 = vmor %vm1945, %vm1946
      %v1948 = vsel %vm1947, %v1939, %v1944
      %v1949 = vrsqrt.pop %v1884
      %v1950 = vmul.f32 %v1949, %v1884
      %v1951 = vmul.f32 %v1950, %v1949
      %v1952 = vmul.f32 0.5, %v1951
      %v1953 = vsub.f32 1.5, %v1952
      %v1954 = vmul.f32 %v1949, %v1953
      %vm1955 = vweird.f32 %v1884
      %vm1956 = vweird.f32 %v1949
      %vm1957 = vmor %vm1955, %vm1956
      %v1958 = vsel %vm1957, %v1949, %v1954
      %v1959 = vrsqrt.pop %v1885
      %v1960 = vmul.f32 %v1959, %v1885
      %v1961 = vmul.f32 %v1960, %v1959
      %v1962 = vmul.f32 0.5, %v1961
      %v1963 = vsub.f32 1.5, %v1962
      %v1964 = vmul.f32 %v1959, %v1963
      %vm1965 = vweird.f32 %v1885
      %vm1966 = vweird.f32 %v1959
      %vm1967 = vmor %vm1965, %vm1966
      %v1968 = vsel %vm1967, %v1959, %v1964
      %v1969 = vrsqrt.pop %v1886
      %v1970 = vmul.f32 %v1969, %v1886
      %v1971 = vmul.f32 %v1970, %v1969
      %v1972 = vmul.f32 0.5, %v1971
      %v1973 = vsub.f32 1.5, %v1972
      %v1974 = vmul.f32 %v1969, %v1973
      %vm1975 = vweird.f32 %v1886
      %vm1976 = vweird.f32 %v1969
      %vm1977 = vmor %vm1975, %vm1976
      %v1978 = vsel %vm1977, %v1969, %v1974
      %v1979 = vrsqrt.pop %v1887
      %v1980 = vmul.f32 %v1979, %v1887
      %v1981 = vmul.f32 %v1980, %v1979
      %v1982 = vmul.f32 0.5, %v1981
      %v1983 = vsub.f32 1.5, %v1982
      %v1984 = vmul.f32 %v1979, %v1983
      %vm1985 = vweird.f32 %v1887
      %vm1986 = vweird.f32 %v1979
      %vm1987 = vmor %vm1985, %vm1986
      %v1988 = vsel %vm1987, %v1979, %v1984
      %v1989 = vrsqrt.pop %v1888
      %v1990 = vmul.f32 %v1989, %v1888
      %v1991 = vmul.f32 %v1990, %v1989
      %v1992 = vmul.f32 0.5, %v1991
      %v1993 = vsub.f32 1.5, %v1992
      %v1994 = vmul.f32 %v1989, %v1993
      %vm1995 = vweird.f32 %v1888
      %vm1996 = vweird.f32 %v1989
      %vm1997 = vmor %vm1995, %vm1996
      %v1998 = vsel %vm1997, %v1989, %v1994
      %v1999 = vrsqrt.pop %v1889
      %v2000 = vmul.f32 %v1999, %v1889
      %v2001 = vmul.f32 %v2000, %v1999
      %v2002 = vmul.f32 0.5, %v2001
      %v2003 = vsub.f32 1.5, %v2002
      %v2004 = vmul.f32 %v1999, %v2003
      %vm2005 = vweird.f32 %v1889
      %vm2006 = vweird.f32 %v1999
      %vm2007 = vmor %vm2005, %vm2006
      %v2008 = vsel %vm2007, %v1999, %v2004
      %v2009 = vrsqrt.pop %v1890
      %v2010 = vmul.f32 %v2009, %v1890
      %v2011 = vmul.f32 %v2010, %v2009
      %v2012 = vmul.f32 0.5, %v2011
      %v2013 = vsub.f32 1.5, %v2012
      %v2014 = vmul.f32 %v2009, %v2013
      %vm2015 = vweird.f32 %v1890
      %vm2016 = vweird.f32 %v2009
      %vm2017 = vmor %vm2015, %vm2016
      %v2018 = vsel %vm2017, %v2009, %v2014
      %v2019 = vrsqrt.pop %v1891
      %v2020 = vmul.f32 %v2019, %v1891
      %v2021 = vmul.f32 %v2020, %v2019
      %v2022 = vmul.f32 0.5, %v2021
      %v2023 = vsub.f32 1.5, %v2022
      %v2024 = vmul.f32 %v2019, %v2023
      %vm2025 = vweird.f32 %v1891
      %vm2026 = vweird.f32 %v2019
      %vm2027 = vmor %vm2025, %vm2026
      %v2028 = vsel %vm2027, %v2019, %v2024
      %v2029 = vrsqrt.pop %v1892
      %v2030 = vmul.f32 %v2029, %v1892
      %v2031 = vmul.f32 %v2030, %v2029
      %v2032 = vmul.f32 0.5, %v2031
      %v2033 = vsub.f32 1.5, %v2032
      %v2034 = vmul.f32 %v2029, %v2033
      %vm2035 = vweird.f32 %v1892
      %vm2036 = vweird.f32 %v2029
      %vm2037 = vmor %vm2035, %vm2036
      %v2038 = vsel %vm2037, %v2029, %v2034
      %v2039 = vrsqrt.pop %v1893
      %v2040 = vmul.f32 %v2039, %v1893
      %v2041 = vmul.f32 %v2040, %v2039
      %v2042 = vmul.f32 0.5, %v2041
      %v2043 = vsub.f32 1.5, %v2042
      %v2044 = vmul.f32 %v2039, %v2043
      %vm2045 = vweird.f32 %v1893
      %vm2046 = vweird.f32 %v2039
      %vm2047 = vmor %vm2045, %vm2046
      %v2048 = vsel %vm2047, %v2039, %v2044
      %v2049 = vrsqrt.pop %v1894
      %v2050 = vmul.f32 %v2049, %v1894
      %v2051 = vmul.f32 %v2050, %v2049
      %v2052 = vmul.f32 0.5, %v2051
      %v2053 = vsub.f32 1.5, %v2052
      %v2054 = vmul.f32 %v2049, %v2053
      %vm2055 = vweird.f32 %v1894
      %vm2056 = vweird.f32 %v2049
      %vm2057 = vmor %vm2055, %vm2056
      %v2058 = vsel %vm2057, %v2049, %v2054
      %v2059 = vrsqrt.pop %v1895
      %v2060 = vmul.f32 %v2059, %v1895
      %v2061 = vmul.f32 %v2060, %v2059
      %v2062 = vmul.f32 0.5, %v2061
      %v2063 = vsub.f32 1.5, %v2062
      %v2064 = vmul.f32 %v2059, %v2063
      %vm2065 = vweird.f32 %v1895
      %vm2066 = vweird.f32 %v2059
      %vm2067 = vmor %vm2065, %vm2066
      %v2068 = vsel %vm2067, %v2059, %v2064
      %v2069 = vrsqrt.pop %v1896
      %v2070 = vmul.f32 %v2069, %v1896
      %v2071 = vmul.f32 %v2070, %v2069
      %v2072 = vmul.f32 0.5, %v2071
      %v2073 = vsub.f32 1.5, %v2072
      %v2074 = vmul.f32 %v2069, %v2073
      %vm2075 = vweird.f32 %v1896
      %vm2076 = vweird.f32 %v2069
      %vm2077 = vmor %vm2075, %vm2076
      %v2078 = vsel %vm2077, %v2069, %v2074
      %v2079 = vrsqrt.pop %v1897
      %v2080 = vmul.f32 %v2079, %v1897
      %v2081 = vmul.f32 %v2080, %v2079
      %v2082 = vmul.f32 0.5, %v2081
      %v2083 = vsub.f32 1.5, %v2082
      %v2084 = vmul.f32 %v2079, %v2083
      %vm2085 = vweird.f32 %v1897
      %vm2086 = vweird.f32 %v2079
      %vm2087 = vmor %vm2085, %vm2086
      %v2088 = vsel %vm2087, %v2079, %v2084
      %v2089 = vrsqrt.pop %v1898
      %v2090 = vmul.f32 %v2089, %v1898
      %v2091 = vmul.f32 %v2090, %v2089
      %v2092 = vmul.f32 0.5, %v2091
      %v2093 = vsub.f32 1.5, %v2092
      %v2094 = vmul.f32 %v2089, %v2093
      %vm2095 = vweird.f32 %v1898
      %vm2096 = vweird.f32 %v2089
      %vm2097 = vmor %vm2095, %vm2096
      %v2098 = vsel %vm2097, %v2089, %v2094
      %v2099 = vrsqrt.pop %v1899
      %v2100 = vmul.f32 %v2099, %v1899
      %v2101 = vmul.f32 %v2100, %v2099
      %v2102 = vmul.f32 0.5, %v2101
      %v2103 = vsub.f32 1.5, %v2102
      %v2104 = vmul.f32 %v2099, %v2103
      %vm2105 = vweird.f32 %v1899
      %vm2106 = vweird.f32 %v2099
      %vm2107 = vmor %vm2105, %vm2106
      %v2108 = vsel %vm2107, %v2099, %v2104
      %v2109 = vrsqrt.pop %v1900
      %v2110 = vmul.f32 %v2109, %v1900
      %v2111 = vmul.f32 %v2110, %v2109
      %v2112 = vmul.f32 0.5, %v2111
      %v2113 = vsub.f32 1.5, %v2112
      %v2114 = vmul.f32 %v2109, %v2113
      %vm2115 = vweird.f32 %v1900
      %vm2116 = vweird.f32 %v2109
      %vm2117 = vmor %vm2115, %vm2116
      %v2118 = vsel %vm2117, %v2109, %v2114
      %v2119 = vrsqrt.pop %v1901
      %v2120 = vmul.f32 %v2119, %v1901
      %v2121 = vmul.f32 %v2120, %v2119
      %v2122 = vmul.f32 0.5, %v2121
      %v2123 = vsub.f32 1.5, %v2122
      %v2124 = vmul.f32 %v2119, %v2123
      %vm2125 = vweird.f32 %v1901
      %vm2126 = vweird.f32 %v2119
      %vm2127 = vmor %vm2125, %vm2126
      %v2128 = vsel %vm2127, %v2119, %v2124
      %v2129 = vrsqrt.pop %v1902
      %v2130 = vmul.f32 %v2129, %v1902
      %v2131 = vmul.f32 %v2130, %v2129
      %v2132 = vmul.f32 0.5, %v2131
      %v2133 = vsub.f32 1.5, %v2132
      %v2134 = vmul.f32 %v2129, %v2133
      %vm2135 = vweird.f32 %v1902
      %vm2136 = vweird.f32 %v2129
      %vm2137 = vmor %vm2135, %vm2136
      %v2138 = vsel %vm2137, %v2129, %v2134
      %v2139 = vrsqrt.pop %v1903
      %v2140 = vmul.f32 %v2139, %v1903
      %v2141 = vmul.f32 %v2140, %v2139
      %v2142 = vmul.f32 0.5, %v2141
      %v2143 = vsub.f32 1.5, %v2142
      %v2144 = vmul.f32 %v2139, %v2143
      %vm2145 = vweird.f32 %v1903
      %vm2146 = vweird.f32 %v2139
      %vm2147 = vmor %vm2145, %vm2146
      %v2148 = vsel %vm2147, %v2139, %v2144
      %v2149 = vrsqrt.pop %v1904
      %v2150 = vmul.f32 %v2149, %v1904
      %v2151 = vmul.f32 %v2150, %v2149
      %v2152 = vmul.f32 0.5, %v2151
      %v2153 = vsub.f32 1.5, %v2152
      %v2154 = vmul.f32 %v2149, %v2153
      %vm2155 = vweird.f32 %v1904
      %vm2156 = vweird.f32 %v2149
      %vm2157 = vmor %vm2155, %vm2156
      %v2158 = vsel %vm2157, %v2149, %v2154
      %v2159 = vrsqrt.pop %v1905
      %v2160 = vmul.f32 %v2159, %v1905
      %v2161 = vmul.f32 %v2160, %v2159
      %v2162 = vmul.f32 0.5, %v2161
      %v2163 = vsub.f32 1.5, %v2162
      %v2164 = vmul.f32 %v2159, %v2163
      %vm2165 = vweird.f32 %v1905
      %vm2166 = vweird.f32 %v2159
      %vm2167 = vmor %vm2165, %vm2166
      %v2168 = vsel %vm2167, %v2159, %v2164
      %v2169 = vrsqrt.pop %v1906
      %v2170 = vmul.f32 %v2169, %v1906
      %v2171 = vmul.f32 %v2170, %v2169
      %v2172 = vmul.f32 0.5, %v2171
      %v2173 = vsub.f32 1.5, %v2172
      %v2174 = vmul.f32 %v2169, %v2173
      %vm2175 = vweird.f32 %v1906
      %vm2176 = vweird.f32 %v2169
      %vm2177 = vmor %vm2175, %vm2176
      %v2178 = vsel %vm2177, %v2169, %v2174
      %v2179 = vrsqrt.pop %v1907
      %v2180 = vmul.f32 %v2179, %v1907
      %v2181 = vmul.f32 %v2180, %v2179
      %v2182 = vmul.f32 0.5, %v2181
      %v2183 = vsub.f32 1.5, %v2182
      %v2184 = vmul.f32 %v2179, %v2183
      %vm2185 = vweird.f32 %v1907
      %vm2186 = vweird.f32 %v2179
      %vm2187 = vmor %vm2185, %vm2186
      %v2188 = vsel %vm2187, %v2179, %v2184
      %v2189 = vrsqrt.pop %v1908
      %v2190 = vmul.f32 %v2189, %v1908
      %v2191 = vmul.f32 %v2190, %v2189
      %v2192 = vmul.f32 0.5, %v2191
      %v2193 = vsub.f32 1.5, %v2192
      %v2194 = vmul.f32 %v2189, %v2193
      %vm2195 = vweird.f32 %v1908
      %vm2196 = vweird.f32 %v2189
      %vm2197 = vmor %vm2195, %vm2196
      %v2198 = vsel %vm2197, %v2189, %v2194
      %v2199 = vrsqrt.pop %v1909
      %v2200 = vmul.f32 %v2199, %v1909
      %v2201 = vmul.f32 %v2200, %v2199
      %v2202 = vmul.f32 0.5, %v2201
      %v2203 = vsub.f32 1.5, %v2202
      %v2204 = vmul.f32 %v2199, %v2203
      %vm2205 = vweird.f32 %v1909
      %vm2206 = vweird.f32 %v2199
      %vm2207 = vmor %vm2205, %vm2206
      %v2208 = vsel %vm2207, %v2199, %v2204
      %v2209 = vrsqrt.pop %v1910
      %v2210 = vmul.f32 %v2209, %v1910
      %v2211 = vmul.f32 %v2210, %v2209
      %v2212 = vmul.f32 0.5, %v2211
      %v2213 = vsub.f32 1.5, %v2212
      %v2214 = vmul.f32 %v2209, %v2213
      %vm2215 = vweird.f32 %v1910
      %vm2216 = vweird.f32 %v2209
      %vm2217 = vmor %vm2215, %vm2216
      %v2218 = vsel %vm2217, %v2209, %v2214
      %v2219 = vrsqrt.pop %v1911
      %v2220 = vmul.f32 %v2219, %v1911
      %v2221 = vmul.f32 %v2220, %v2219
      %v2222 = vmul.f32 0.5, %v2221
      %v2223 = vsub.f32 1.5, %v2222
      %v2224 = vmul.f32 %v2219, %v2223
      %vm2225 = vweird.f32 %v1911
      %vm2226 = vweird.f32 %v2219
      %vm2227 = vmor %vm2225, %vm2226
      %v2228 = vsel %vm2227, %v2219, %v2224
      %v2229 = vrsqrt.pop %v1912
      %v2230 = vmul.f32 %v2229, %v1912
      %v2231 = vmul.f32 %v2230, %v2229
      %v2232 = vmul.f32 0.5, %v2231
      %v2233 = vsub.f32 1.5, %v2232
      %v2234 = vmul.f32 %v2229, %v2233
      %vm2235 = vweird.f32 %v1912
      %vm2236 = vweird.f32 %v2229
      %vm2237 = vmor %vm2235, %vm2236
      %v2238 = vsel %vm2237, %v2229, %v2234
      %v2239 = vrsqrt.pop %v1913
      %v2240 = vmul.f32 %v2239, %v1913
      %v2241 = vmul.f32 %v2240, %v2239
      %v2242 = vmul.f32 0.5, %v2241
      %v2243 = vsub.f32 1.5, %v2242
      %v2244 = vmul.f32 %v2239, %v2243
      %vm2245 = vweird.f32 %v1913
      %vm2246 = vweird.f32 %v2239
      %vm2247 = vmor %vm2245, %vm2246
      %v2248 = vsel %vm2247, %v2239, %v2244
      %v2249 = vrsqrt.pop %v1914
      %v2250 = vmul.f32 %v2249, %v1914
      %v2251 = vmul.f32 %v2250, %v2249
      %v2252 = vmul.f32 0.5, %v2251
      %v2253 = vsub.f32 1.5, %v2252
      %v2254 = vmul.f32 %v2249, %v2253
      %vm2255 = vweird.f32 %v1914
      %vm2256 = vweird.f32 %v2249
      %vm2257 = vmor %vm2255, %vm2256
      %v2258 = vsel %vm2257, %v2249, %v2254
      %v2259 = vrsqrt.pop %v1915
      %v2260 = vmul.f32 %v2259, %v1915
      %v2261 = vmul.f32 %v2260, %v2259
      %v2262 = vmul.f32 0.5, %v2261
      %v2263 = vsub.f32 1.5, %v2262
      %v2264 = vmul.f32 %v2259, %v2263
      %vm2265 = vweird.f32 %v1915
      %vm2266 = vweird.f32 %v2259
      %vm2267 = vmor %vm2265, %vm2266
      %v2268 = vsel %vm2267, %v2259, %v2264
      %v2269 = vrsqrt.pop %v1916
      %v2270 = vmul.f32 %v2269, %v1916
      %v2271 = vmul.f32 %v2270, %v2269
      %v2272 = vmul.f32 0.5, %v2271
      %v2273 = vsub.f32 1.5, %v2272
      %v2274 = vmul.f32 %v2269, %v2273
      %vm2275 = vweird.f32 %v1916
      %vm2276 = vweird.f32 %v2269
      %vm2277 = vmor %vm2275, %vm2276
      %v2278 = vsel %vm2277, %v2269, %v2274
      %v2279 = vrsqrt.pop %v1917
      %v2280 = vmul.f32 %v2279, %v1917
      %v2281 = vmul.f32 %v2280, %v2279
      %v2282 = vmul.f32 0.5, %v2281
      %v2283 = vsub.f32 1.5, %v2282
      %v2284 = vmul.f32 %v2279, %v2283
      %vm2285 = vweird.f32 %v1917
      %vm2286 = vweird.f32 %v2279
      %vm2287 = vmor %vm2285, %vm2286
      %v2288 = vsel %vm2287, %v2279, %v2284
      %v2289 = vrsqrt.pop %v1918
      %v2290 = vmul.f32 %v2289, %v1918
      %v2291 = vmul.f32 %v2290, %v2289
      %v2292 = vmul.f32 0.5, %v2291
      %v2293 = vsub.f32 1.5, %v2292
      %v2294 = vmul.f32 %v2289, %v2293
      %vm2295 = vweird.f32 %v1918
      %vm2296 = vweird.f32 %v2289
      %vm2297 = vmor %vm2295, %vm2296
      %v2298 = vsel %vm2297, %v2289, %v2294
      %v2299 = vmul.f32 %v1691, %v1928
      %v2300 = vmul.f32 %v1692, %v1938
      %v2301 = vmul.f32 %v1693, %v1948
      %v2302 = vmul.f32 %v1694, %v1958
      %v2303 = vmul.f32 %v1695, %v1968
      %v2304 = vmul.f32 %v1696, %v1978
      %v2305 = vmul.f32 %v1697, %v1988
      %v2306 = vmul.f32 %v1698, %v1998
      %v2307 = vmul.f32 %v1699, %v2008
      %v2308 = vmul.f32 %v1700, %v2018
      %v2309 = vmul.f32 %v1701, %v2028
      %v2310 = vmul.f32 %v1702, %v2038
      %v2311 = vmul.f32 %v1703, %v2048
      %v2312 = vmul.f32 %v1704, %v2058
      %v2313 = vmul.f32 %v1705, %v2068
      %v2314 = vmul.f32 %v1706, %v2078
      %v2315 = vmul.f32 %v1707, %v2088
      %v2316 = vmul.f32 %v1708, %v2098
      %v2317 = vmul.f32 %v1709, %v2108
      %v2318 = vmul.f32 %v1710, %v2118
      %v2319 = vmul.f32 %v1711, %v2128
      %v2320 = vmul.f32 %v1712, %v2138
      %v2321 = vmul.f32 %v1713, %v2148
      %v2322 = vmul.f32 %v1714, %v2158
      %v2323 = vmul.f32 %v1715, %v2168
      %v2324 = vmul.f32 %v1716, %v2178
      %v2325 = vmul.f32 %v1717, %v2188
      %v2326 = vmul.f32 %v1718, %v2198
      %v2327 = vmul.f32 %v1719, %v2208
      %v2328 = vmul.f32 %v1720, %v2218
      %v2329 = vmul.f32 %v1721, %v2228
      %v2330 = vmul.f32 %v1722, %v2238
      %v2331 = vmul.f32 %v1723, %v2248
      %v2332 = vmul.f32 %v1724, %v2258
      %v2333 = vmul.f32 %v1725, %v2268
      %v2334 = vmul.f32 %v1726, %v2278
      %v2335 = vmul.f32 %v1727, %v2288
      %v2336 = vmul.f32 %v1728, %v2298
      %v2337 = vperm.slane %v239, 5
      %v2338 = vmul.f32 %v2299, %v2337
      %v2339 = vmul.f32 %v2300, %v2337
      %v2340 = vmul.f32 %v2301, %v2337
      %v2341 = vmul.f32 %v2302, %v2337
      %v2342 = vmul.f32 %v2303, %v2337
      %v2343 = vmul.f32 %v2304, %v2337
      %v2344 = vmul.f32 %v2305, %v2337
      %v2345 = vmul.f32 %v2306, %v2337
      %v2346 = vmul.f32 %v2307, %v2337
      %v2347 = vmul.f32 %v2308, %v2337
      %v2348 = vmul.f32 %v2309, %v2337
      %v2349 = vmul.f32 %v2310, %v2337
      %v2350 = vmul.f32 %v2311, %v2337
      %v2351 = vmul.f32 %v2312, %v2337
      %v2352 = vmul.f32 %v2313, %v2337
      %v2353 = vmul.f32 %v2314, %v2337
      %v2354 = vmul.f32 %v2315, %v2337
      %v2355 = vmul.f32 %v2316, %v2337
      %v2356 = vmul.f32 %v2317, %v2337
      %v2357 = vmul.f32 %v2318, %v2337
      %v2358 = vmul.f32 %v2319, %v2337
      %v2359 = vmul.f32 %v2320, %v2337
      %v2360 = vmul.f32 %v2321, %v2337
      %v2361 = vmul.f32 %v2322, %v2337
      %v2362 = vmul.f32 %v2323, %v2337
      %v2363 = vmul.f32 %v2324, %v2337
      %v2364 = vmul.f32 %v2325, %v2337
      %v2365 = vmul.f32 %v2326, %v2337
      %v2366 = vmul.f32 %v2327, %v2337
      %v2367 = vmul.f32 %v2328, %v2337
      %v2368 = vmul.f32 %v2329, %v2337
      %v2369 = vmul.f32 %v2330, %v2337
      %v2370 = vmul.f32 %v2331, %v2337
      %v2371 = vmul.f32 %v2332, %v2337
      %v2372 = vmul.f32 %v2333, %v2337
      %v2373 = vmul.f32 %v2334, %v2337
      %v2374 = vmul.f32 %v2335, %v2337
      %v2375 = vmul.f32 %v2336, %v2337
      %v2376 = vperm.slane %v239, 6
      %v2377 = vadd.f32 %v2338, %v2376
      %v2378 = vadd.f32 %v2339, %v2376
      %v2379 = vadd.f32 %v2340, %v2376
      %v2380 = vadd.f32 %v2341, %v2376
      %v2381 = vadd.f32 %v2342, %v2376
      %v2382 = vadd.f32 %v2343, %v2376
      %v2383 = vadd.f32 %v2344, %v2376
      %v2384 = vadd.f32 %v2345, %v2376
      %v2385 = vadd.f32 %v2346, %v2376
      %v2386 = vadd.f32 %v2347, %v2376
      %v2387 = vadd.f32 %v2348, %v2376
      %v2388 = vadd.f32 %v2349, %v2376
      %v2389 = vadd.f32 %v2350, %v2376
      %v2390 = vadd.f32 %v2351, %v2376
      %v2391 = vadd.f32 %v2352, %v2376
      %v2392 = vadd.f32 %v2353, %v2376
      %v2393 = vadd.f32 %v2354, %v2376
      %v2394 = vadd.f32 %v2355, %v2376
      %v2395 = vadd.f32 %v2356, %v2376
      %v2396 = vadd.f32 %v2357, %v2376
      %v2397 = vadd.f32 %v2358, %v2376
      %v2398 = vadd.f32 %v2359, %v2376
      %v2399 = vadd.f32 %v2360, %v2376
      %v2400 = vadd.f32 %v2361, %v2376
      %v2401 = vadd.f32 %v2362, %v2376
      %v2402 = vadd.f32 %v2363, %v2376
      %v2403 = vadd.f32 %v2364, %v2376
      %v2404 = vadd.f32 %v2365, %v2376
      %v2405 = vadd.f32 %v2366, %v2376
      %v2406 = vadd.f32 %v2367, %v2376
      %v2407 = vadd.f32 %v2368, %v2376
      %v2408 = vadd.f32 %v2369, %v2376
      %v2409 = vadd.f32 %v2370, %v2376
      %v2410 = vadd.f32 %v2371, %v2376
      %v2411 = vadd.f32 %v2372, %v2376
      %v2412 = vadd.f32 %v2373, %v2376
      %v2413 = vadd.f32 %v2374, %v2376
      %v2414 = vadd.f32 %v2375, %v2376
      %vm2415 = vcmp.ge.f32.partialorder %v2377, 0.0
      %vm2416 = vcmp.ge.f32.partialorder %v2378, 0.0
      %vm2417 = vcmp.ge.f32.partialorder %v2379, 0.0
      %vm2418 = vcmp.ge.f32.partialorder %v2380, 0.0
      %vm2419 = vcmp.ge.f32.partialorder %v2381, 0.0
      %vm2420 = vcmp.ge.f32.partialorder %v2382, 0.0
      %vm2421 = vcmp.ge.f32.partialorder %v2383, 0.0
      %vm2422 = vcmp.ge.f32.partialorder %v2384, 0.0
      %vm2423 = vcmp.ge.f32.partialorder %v2385, 0.0
      %vm2424 = vcmp.ge.f32.partialorder %v2386, 0.0
      %vm2425 = vcmp.ge.f32.partialorder %v2387, 0.0
      %vm2426 = vcmp.ge.f32.partialorder %v2388, 0.0
      %vm2427 = vcmp.ge.f32.partialorder %v2389, 0.0
      %vm2428 = vcmp.ge.f32.partialorder %v2390, 0.0
      %vm2429 = vcmp.ge.f32.partialorder %v2391, 0.0
      %vm2430 = vcmp.ge.f32.partialorder %v2392, 0.0
      %vm2431 = vcmp.ge.f32.partialorder %v2393, 0.0
      %vm2432 = vcmp.ge.f32.partialorder %v2394, 0.0
      %vm2433 = vcmp.ge.f32.partialorder %v2395, 0.0
      %vm2434 = vcmp.ge.f32.partialorder %v2396, 0.0
      %vm2435 = vcmp.ge.f32.partialorder %v2397, 0.0
      %vm2436 = vcmp.ge.f32.partialorder %v2398, 0.0
      %vm2437 = vcmp.ge.f32.partialorder %v2399, 0.0
      %vm2438 = vcmp.ge.f32.partialorder %v2400, 0.0
      %vm2439 = vcmp.ge.f32.partialorder %v2401, 0.0
      %vm2440 = vcmp.ge.f32.partialorder %v2402, 0.0
      %vm2441 = vcmp.ge.f32.partialorder %v2403, 0.0
      %vm2442 = vcmp.ge.f32.partialorder %v2404, 0.0
      %vm2443 = vcmp.ge.f32.partialorder %v2405, 0.0
      %vm2444 = vcmp.ge.f32.partialorder %v2406, 0.0
      %vm2445 = vcmp.ge.f32.partialorder %v2407, 0.0
      %vm2446 = vcmp.ge.f32.partialorder %v2408, 0.0
      %vm2447 = vcmp.ge.f32.partialorder %v2409, 0.0
      %vm2448 = vcmp.ge.f32.partialorder %v2410, 0.0
      %vm2449 = vcmp.ge.f32.partialorder %v2411, 0.0
      %vm2450 = vcmp.ge.f32.partialorder %v2412, 0.0
      %vm2451 = vcmp.ge.f32.partialorder %v2413, 0.0
      %vm2452 = vcmp.ge.f32.partialorder %v2414, 0.0
      %v2453 = vperm.slane %v239, 7
      %v2454 = vmul.f32 %v2453, %v2377
      %v2455 = vmul.f32 %v2453, %v2378
      %v2456 = vmul.f32 %v2453, %v2379
      %v2457 = vmul.f32 %v2453, %v2380
      %v2458 = vmul.f32 %v2453, %v2381
      %v2459 = vmul.f32 %v2453, %v2382
      %v2460 = vmul.f32 %v2453, %v2383
      %v2461 = vmul.f32 %v2453, %v2384
      %v2462 = vmul.f32 %v2453, %v2385
      %v2463 = vmul.f32 %v2453, %v2386
      %v2464 = vmul.f32 %v2453, %v2387
      %v2465 = vmul.f32 %v2453, %v2388
      %v2466 = vmul.f32 %v2453, %v2389
      %v2467 = vmul.f32 %v2453, %v2390
      %v2468 = vmul.f32 %v2453, %v2391
      %v2469 = vmul.f32 %v2453, %v2392
      %v2470 = vmul.f32 %v2453, %v2393
      %v2471 = vmul.f32 %v2453, %v2394
      %v2472 = vmul.f32 %v2453, %v2395
      %v2473 = vmul.f32 %v2453, %v2396
      %v2474 = vmul.f32 %v2453, %v2397
      %v2475 = vmul.f32 %v2453, %v2398
      %v2476 = vmul.f32 %v2453, %v2399
      %v2477 = vmul.f32 %v2453, %v2400
      %v2478 = vmul.f32 %v2453, %v2401
      %v2479 = vmul.f32 %v2453, %v2402
      %v2480 = vmul.f32 %v2453, %v2403
      %v2481 = vmul.f32 %v2453, %v2404
      %v2482 = vmul.f32 %v2453, %v2405
      %v2483 = vmul.f32 %v2453, %v2406
      %v2484 = vmul.f32 %v2453, %v2407
      %v2485 = vmul.f32 %v2453, %v2408
      %v2486 = vmul.f32 %v2453, %v2409
      %v2487 = vmul.f32 %v2453, %v2410
      %v2488 = vmul.f32 %v2453, %v2411
      %v2489 = vmul.f32 %v2453, %v2412
      %v2490 = vmul.f32 %v2453, %v2413
      %v2491 = vmul.f32 %v2453, %v2414
      %v2492 = vsel %vm2415, %v2377, %v2454
      %v2493 = vsel %vm2416, %v2378, %v2455
      %v2494 = vsel %vm2417, %v2379, %v2456
      %v2495 = vsel %vm2418, %v2380, %v2457
      %v2496 = vsel %vm2419, %v2381, %v2458
      %v2497 = vsel %vm2420, %v2382, %v2459
      %v2498 = vsel %vm2421, %v2383, %v2460
      %v2499 = vsel %vm2422, %v2384, %v2461
      %v2500 = vsel %vm2423, %v2385, %v2462
      %v2501 = vsel %vm2424, %v2386, %v2463
      %v2502 = vsel %vm2425, %v2387, %v2464
      %v2503 = vsel %vm2426, %v2388, %v2465
      %v2504 = vsel %vm2427, %v2389, %v2466
      %v2505 = vsel %vm2428, %v2390, %v2467
      %v2506 = vsel %vm2429, %v2391, %v2468
      %v2507 = vsel %vm2430, %v2392, %v2469
      %v2508 = vsel %vm2431, %v2393, %v2470
      %v2509 = vsel %vm2432, %v2394, %v2471
      %v2510 = vsel %vm2433, %v2395, %v2472
      %v2511 = vsel %vm2434, %v2396, %v2473
      %v2512 = vsel %vm2435, %v2397, %v2474
      %v2513 = vsel %vm2436, %v2398, %v2475
      %v2514 = vsel %vm2437, %v2399, %v2476
      %v2515 = vsel %vm2438, %v2400, %v2477
      %v2516 = vsel %vm2439, %v2401, %v2478
      %v2517 = vsel %vm2440, %v2402, %v2479
      %v2518 = vsel %vm2441, %v2403, %v2480
      %v2519 = vsel %vm2442, %v2404, %v2481
      %v2520 = vsel %vm2443, %v2405, %v2482
      %v2521 = vsel %vm2444, %v2406, %v2483
      %v2522 = vsel %vm2445, %v2407, %v2484
      %v2523 = vsel %vm2446, %v2408, %v2485
      %v2524 = vsel %vm2447, %v2409, %v2486
      %v2525 = vsel %vm2448, %v2410, %v2487
      %v2526 = vsel %vm2449, %v2411, %v2488
      %v2527 = vsel %vm2450, %v2412, %v2489
      %v2528 = vsel %vm2451, %v2413, %v2490
      %v2529 = vsel %vm2452, %v2414, %v2491
      %v2530 = vperm.slane %v240, 0
      %v2531 = vmul.f32 %v2492, %v2530
      %v2532 = vmul.f32 %v2493, %v2530
      %v2533 = vmul.f32 %v2494, %v2530
      %v2534 = vmul.f32 %v2495, %v2530
      %v2535 = vmul.f32 %v2496, %v2530
      %v2536 = vmul.f32 %v2497, %v2530
      %v2537 = vmul.f32 %v2498, %v2530
      %v2538 = vmul.f32 %v2499, %v2530
      %v2539 = vmul.f32 %v2500, %v2530
      %v2540 = vmul.f32 %v2501, %v2530
      %v2541 = vmul.f32 %v2502, %v2530
      %v2542 = vmul.f32 %v2503, %v2530
      %v2543 = vmul.f32 %v2504, %v2530
      %v2544 = vmul.f32 %v2505, %v2530
      %v2545 = vmul.f32 %v2506, %v2530
      %v2546 = vmul.f32 %v2507, %v2530
      %v2547 = vmul.f32 %v2508, %v2530
      %v2548 = vmul.f32 %v2509, %v2530
      %v2549 = vmul.f32 %v2510, %v2530
      %v2550 = vmul.f32 %v2511, %v2530
      %v2551 = vmul.f32 %v2512, %v2530
      %v2552 = vmul.f32 %v2513, %v2530
      %v2553 = vmul.f32 %v2514, %v2530
      %v2554 = vmul.f32 %v2515, %v2530
      %v2555 = vmul.f32 %v2516, %v2530
      %v2556 = vmul.f32 %v2517, %v2530
      %v2557 = vmul.f32 %v2518, %v2530
      %v2558 = vmul.f32 %v2519, %v2530
      %v2559 = vmul.f32 %v2520, %v2530
      %v2560 = vmul.f32 %v2521, %v2530
      %v2561 = vmul.f32 %v2522, %v2530
      %v2562 = vmul.f32 %v2523, %v2530
      %v2563 = vmul.f32 %v2524, %v2530
      %v2564 = vmul.f32 %v2525, %v2530
      %v2565 = vmul.f32 %v2526, %v2530
      %v2566 = vmul.f32 %v2527, %v2530
      %v2567 = vmul.f32 %v2528, %v2530
      %v2568 = vmul.f32 %v2529, %v2530
      %2569 = vadd.xlane.f32.xlu0 %v2531
      %v2570 = vpop.xlane.xlu0 %2569
      %2571 = vadd.xlane.f32.xlu0 %v2532
      %v2572 = vpop.xlane.xlu0 %2571
      %2573 = vadd.xlane.f32.xlu0 %v2533
      %v2574 = vpop.xlane.xlu0 %2573
      %2575 = vadd.xlane.f32.xlu0 %v2534
      %v2576 = vpop.xlane.xlu0 %2575
      %2577 = vadd.xlane.f32.xlu0 %v2535
      %v2578 = vpop.xlane.xlu0 %2577
      %2579 = vadd.xlane.f32.xlu0 %v2536
      %v2580 = vpop.xlane.xlu0 %2579
      %2581 = vadd.xlane.f32.xlu0 %v2537
      %v2582 = vpop.xlane.xlu0 %2581
      %2583 = vadd.xlane.f32.xlu0 %v2538
      %v2584 = vpop.xlane.xlu0 %2583
      %2585 = vadd.xlane.f32.xlu0 %v2539
      %v2586 = vpop.xlane.xlu0 %2585
      %2587 = vadd.xlane.f32.xlu0 %v2540
      %v2588 = vpop.xlane.xlu0 %2587
      %2589 = vadd.xlane.f32.xlu0 %v2541
      %v2590 = vpop.xlane.xlu0 %2589
      %2591 = vadd.xlane.f32.xlu0 %v2542
      %v2592 = vpop.xlane.xlu0 %2591
      %2593 = vadd.xlane.f32.xlu0 %v2543
      %v2594 = vpop.xlane.xlu0 %2593
      %2595 = vadd.xlane.f32.xlu0 %v2544
      %v2596 = vpop.xlane.xlu0 %2595
      %2597 = vadd.xlane.f32.xlu0 %v2545
      %v2598 = vpop.xlane.xlu0 %2597
      %2599 = vadd.xlane.f32.xlu0 %v2546
      %v2600 = vpop.xlane.xlu0 %2599
      %2601 = vadd.xlane.f32.xlu0 %v2547
      %v2602 = vpop.xlane.xlu0 %2601
      %2603 = vadd.xlane.f32.xlu0 %v2548
      %v2604 = vpop.xlane.xlu0 %2603
      %2605 = vadd.xlane.f32.xlu0 %v2549
      %v2606 = vpop.xlane.xlu0 %2605
      %2607 = vadd.xlane.f32.xlu0 %v2550
      %v2608 = vpop.xlane.xlu0 %2607
      %2609 = vadd.xlane.f32.xlu0 %v2551
      %v2610 = vpop.xlane.xlu0 %2609
      %2611 = vadd.xlane.f32.xlu0 %v2552
      %v2612 = vpop.xlane.xlu0 %2611
      %2613 = vadd.xlane.f32.xlu0 %v2553
      %v2614 = vpop.xlane.xlu0 %2613
      %2615 = vadd.xlane.f32.xlu0 %v2554
      %v2616 = vpop.xlane.xlu0 %2615
      %2617 = vadd.xlane.f32.xlu0 %v2555
      %v2618 = vpop.xlane.xlu0 %2617
      %2619 = vadd.xlane.f32.xlu0 %v2556
      %v2620 = vpop.xlane.xlu0 %2619
      %2621 = vadd.xlane.f32.xlu0 %v2557
      %v2622 = vpop.xlane.xlu0 %2621
      %2623 = vadd.xlane.f32.xlu0 %v2558
      %v2624 = vpop.xlane.xlu0 %2623
      %2625 = vadd.xlane.f32.xlu0 %v2559
      %v2626 = vpop.xlane.xlu0 %2625
      %2627 = vadd.xlane.f32.xlu0 %v2560
      %v2628 = vpop.xlane.xlu0 %2627
      %2629 = vadd.xlane.f32.xlu0 %v2561
      %v2630 = vpop.xlane.xlu0 %2629
      %2631 = vadd.xlane.f32.xlu0 %v2562
      %v2632 = vpop.xlane.xlu0 %2631
      %2633 = vadd.xlane.f32.xlu0 %v2563
      %v2634 = vpop.xlane.xlu0 %2633
      %2635 = vadd.xlane.f32.xlu0 %v2564
      %v2636 = vpop.xlane.xlu0 %2635
      %2637 = vadd.xlane.f32.xlu0 %v2565
      %v2638 = vpop.xlane.xlu0 %2637
      %2639 = vadd.xlane.f32.xlu0 %v2566
      %v2640 = vpop.xlane.xlu0 %2639
      %2641 = vadd.xlane.f32.xlu0 %v2567
      %v2642 = vpop.xlane.xlu0 %2641
      %2643 = vadd.xlane.f32.xlu0 %v2568
      %v2644 = vpop.xlane.xlu0 %2643
      %v2645 = vperm.slane %v240, 1
      %v2646 = vadd.f32 %v2570, %v2645
      %v2647 = vadd.f32 %v2572, %v2645
      %v2648 = vadd.f32 %v2574, %v2645
      %v2649 = vadd.f32 %v2576, %v2645
      %v2650 = vadd.f32 %v2578, %v2645
      %v2651 = vadd.f32 %v2580, %v2645
      %v2652 = vadd.f32 %v2582, %v2645
      %v2653 = vadd.f32 %v2584, %v2645
      %v2654 = vadd.f32 %v2586, %v2645
      %v2655 = vadd.f32 %v2588, %v2645
      %v2656 = vadd.f32 %v2590, %v2645
      %v2657 = vadd.f32 %v2592, %v2645
      %v2658 = vadd.f32 %v2594, %v2645
      %v2659 = vadd.f32 %v2596, %v2645
      %v2660 = vadd.f32 %v2598, %v2645
      %v2661 = vadd.f32 %v2600, %v2645
      %v2662 = vadd.f32 %v2602, %v2645
      %v2663 = vadd.f32 %v2604, %v2645
      %v2664 = vadd.f32 %v2606, %v2645
      %v2665 = vadd.f32 %v2608, %v2645
      %v2666 = vadd.f32 %v2610, %v2645
      %v2667 = vadd.f32 %v2612, %v2645
      %v2668 = vadd.f32 %v2614, %v2645
      %v2669 = vadd.f32 %v2616, %v2645
      %v2670 = vadd.f32 %v2618, %v2645
      %v2671 = vadd.f32 %v2620, %v2645
      %v2672 = vadd.f32 %v2622, %v2645
      %v2673 = vadd.f32 %v2624, %v2645
      %v2674 = vadd.f32 %v2626, %v2645
      %v2675 = vadd.f32 %v2628, %v2645
      %v2676 = vadd.f32 %v2630, %v2645
      %v2677 = vadd.f32 %v2632, %v2645
      %v2678 = vadd.f32 %v2634, %v2645
      %v2679 = vadd.f32 %v2636, %v2645
      %v2680 = vadd.f32 %v2638, %v2645
      %v2681 = vadd.f32 %v2640, %v2645
      %v2682 = vadd.f32 %v2642, %v2645
      %v2683 = vadd.f32 %v2644, %v2645
      %vm2684 = vcmask 7168
      %2685 = vst.msk [vmem:[%s199] sm:$0xff] %vm2684, %v2646
      %2686 = vst.msk [vmem:[%s199 + $0x8] sm:$0xff] %vm2684, %v2647
      %2687 = vst.msk [vmem:[%s199 + $0x10] sm:$0xff] %vm2684, %v2648
      %2688 = vst.msk [vmem:[%s199 + $0x18] sm:$0xff] %vm2684, %v2649
      %2689 = vst.msk [vmem:[%s199 + $0x20] sm:$0xff] %vm2684, %v2650
      %2690 = vst.msk [vmem:[%s199 + $0x28] sm:$0xff] %vm2684, %v2651
      %2691 = vst.msk [vmem:[%s199 + $0x30] sm:$0xff] %vm2684, %v2652
      %2692 = vst.msk [vmem:[%s199 + $0x38] sm:$0xff] %vm2684, %v2653
      %2693 = vst.msk [vmem:[%s199 + $0x40] sm:$0xff] %vm2684, %v2654
      %2694 = vst.msk [vmem:[%s199 + $0x48] sm:$0xff] %vm2684, %v2655
      %2695 = vst.msk [vmem:[%s199 + $0x50] sm:$0xff] %vm2684, %v2656
      %2696 = vst.msk [vmem:[%s199 + $0x58] sm:$0xff] %vm2684, %v2657
      %2697 = vst.msk [vmem:[%s199 + $0x60] sm:$0xff] %vm2684, %v2658
      %2698 = vst.msk [vmem:[%s199 + $0x68] sm:$0xff] %vm2684, %v2659
      %2699 = vst.msk [vmem:[%s199 + $0x70] sm:$0xff] %vm2684, %v2660
      %2700 = vst.msk [vmem:[%s199 + $0x78] sm:$0xff] %vm2684, %v2661
      %2701 = vst.msk [vmem:[%s199 + $0x80] sm:$0xff] %vm2684, %v2662
      %2702 = vst.msk [vmem:[%s199 + $0x88] sm:$0xff] %vm2684, %v2663
      %2703 = vst.msk [vmem:[%s199 + $0x90] sm:$0xff] %vm2684, %v2664
      %2704 = vst.msk [vmem:[%s199 + $0x98] sm:$0xff] %vm2684, %v2665
      %2705 = vst.msk [vmem:[%s199 + $0xa0] sm:$0xff] %vm2684, %v2666
      %2706 = vst.msk [vmem:[%s199 + $0xa8] sm:$0xff] %vm2684, %v2667
      %2707 = vst.msk [vmem:[%s199 + $0xb0] sm:$0xff] %vm2684, %v2668
      %2708 = vst.msk [vmem:[%s199 + $0xb8] sm:$0xff] %vm2684, %v2669
      %2709 = vst.msk [vmem:[%s199 + $0xc0] sm:$0xff] %vm2684, %v2670
      %2710 = vst.msk [vmem:[%s199 + $0xc8] sm:$0xff] %vm2684, %v2671
      %2711 = vst.msk [vmem:[%s199 + $0xd0] sm:$0xff] %vm2684, %v2672
      %2712 = vst.msk [vmem:[%s199 + $0xd8] sm:$0xff] %vm2684, %v2673
      %2713 = vst.msk [vmem:[%s199 + $0xe0] sm:$0xff] %vm2684, %v2674
      %2714 = vst.msk [vmem:[%s199 + $0xe8] sm:$0xff] %vm2684, %v2675
      %2715 = vst.msk [vmem:[%s199 + $0xf0] sm:$0xff] %vm2684, %v2676
      %2716 = vst.msk [vmem:[%s199 + $0xf8] sm:$0xff] %vm2684, %v2677
      %2717 = vst.msk [vmem:[%s199 + $0x100] sm:$0xff] %vm2684, %v2678
      %2718 = vst.msk [vmem:[%s199 + $0x108] sm:$0xff] %vm2684, %v2679
      %2719 = vst.msk [vmem:[%s199 + $0x110] sm:$0xff] %vm2684, %v2680
      %2720 = vst.msk [vmem:[%s199 + $0x118] sm:$0xff] %vm2684, %v2681
      %2721 = vst.msk [vmem:[%s199 + $0x120] sm:$0xff] %vm2684, %v2682
      %2722 = vst.msk [vmem:[%s199 + $0x128] sm:$0xff] %vm2684, %v2683
      %s2723 = smul.u32 38, %s15
      %p2724 = scmp.lt.s32.totalorder %s2723, 75
      %s2725 = scalar_select %p2724, %s2723, 75
      %s2726 = smul.addr %s2725, 8
      %s2727 = scalar_lea.vmem %s4, %s2726
      // Predicated region
      $region37: #{_predictor_forward_impl.1} parent=35 // pred_check
        %p2728 = pneg %p122
      $region38: #{_predictor_forward_impl.1} parent=35 // pred_check_branch
        %2730 = sbr.rel (%p2728) target = $region40
      $region39: #{_predictor_forward_impl.1} parent=35 // pred_region
        %s2731 = smul.u32 38, %s15
      $region40: #{_predictor_forward_impl.1} parent=35 // pred_fallthru
        _
    $region36: #{_predictor_forward_impl.1} parent=5 // pred_fallthru
      _
    %p2732 = scmp.le.s32.totalorder 2, %s10
    // Predicated region
    $region41: #{_predictor_forward_impl.1} parent=5 // pred_check
      %p2733 = pneg %p2732
    $region42: #{_predictor_forward_impl.1} parent=5 // pred_check_branch
      %2735 = sbr.rel (%p2733) target = $region44
    $region43: #{_predictor_forward_impl.1} parent=5 // pred_region
      %s2736 = ssub.s32 %s10, 2
      // Predicated region
      $region45: #{_predictor_forward_impl.1} parent=43 // pred_check
        %p2737 = pneg %p128
      $region46: #{_predictor_forward_impl.1} parent=43 // pred_check_branch
        %2739 = sbr.rel (%p2737) target = $region48
      $region47: #{_predictor_forward_impl.1} parent=43 // pred_region
        %s2740 = smul.u32 38, %s16
        %p2741 = scmp.lt.s32.totalorder %s2740, 75
        %s2742 = scalar_select %p2741, %s2740, 75
        %s2743 = smul.addr %s2742, 8
        %s2744 = scalar_lea.vmem %s4, %s2743
      $region48: #{_predictor_forward_impl.1} parent=43 // pred_fallthru
        _
    $region44: #{_predictor_forward_impl.1} parent=5 // pred_fallthru
      _
  $region6: #{_predictor_forward_impl.1} parent=0 // loop_footer
    %s14 = sadd.s32 1, %s10
  $region7: #{_predictor_forward_impl.1} parent=0 // loop_footer_branch
    %9 = sbr.rel target = $region3
  $region8: #{_predictor_forward_impl.1} parent=0 // loop_exit
    _

</llo_original>
